<compile_context>
chip_gen: v6e
topology: v6e:2x2x1
jax: 0.10.0
libtpu: 0.0.40
codegen_flags: <defaults>
</compile_context>

<pallas_src>
import math

import jax
import jax.numpy as jnp
from jax.experimental import pallas as pl
from jax.experimental.pallas import tpu as pltpu


# ----------------------------------------------------------------------------
# Fused kernel: grid=(1,).  All layers + FC head in one invocation.
# Scratch: gx_scr (S, B, 4H) holds the hoisted input-projection gates of the
# current layer; h_all_scr (S, B, H) holds the current layer's hidden outputs
# (input of the next layer / input of the FC head).
# ----------------------------------------------------------------------------
def _make_fused_kernel(B, S, H, n_layers):
    def kernel(*refs):
        x_ref = refs[0]                                            # (B, S, Din) f32
        layer_refs = [tuple(refs[1 + 3 * l: 4 + 3 * l]) for l in range(n_layers)]
        wfc_ref = refs[1 + 3 * n_layers]                           # (H, 2)  bf16
        out_ref = refs[2 + 3 * n_layers]                           # (B, S, 2) f32
        gx_scr = refs[3 + 3 * n_layers]                            # (S, B, 4H) f32
        h_all_scr = refs[4 + 3 * n_layers]                         # (S, B, H)  f32

        for layer, (wih_ref, whh_ref, b_ref) in enumerate(layer_refs):
            wih = wih_ref[...]                                     # (Din_l, 4H) bf16
            whh = whh_ref[...]                                     # (H, 4H)     bf16
            bias = b_ref[...]                                      # (1, 4H)     f32

            # Hoisted input projection: all S timesteps in one matmul per batch
            # row (M=S) instead of S tiny M=B matmuls inside the serial loop.
            for b in range(B):
                if layer == 0:
                    x_b = x_ref[b].astype(jnp.bfloat16)            # (S, Din)
                else:
                    x_b = h_all_scr[:, b, :].astype(jnp.bfloat16)  # (S, H)
                gx_scr[:, b, :] = (
                    jnp.dot(x_b, wih, preferred_element_type=jnp.float32)
                    + bias)                                        # (S, 4H) f32

            # Serial recurrence: only h @ W_hh + element-wise update per step.
            def step(t, carry):
                h, c = carry                                       # (B, H) f32
                gates = gx_scr[t] + jnp.dot(
                    h.astype(jnp.bfloat16), whh,
                    preferred_element_type=jnp.float32)            # (B, 4H) f32
                # One sigmoid + one tanh over the full 4H=128-lane gate vector.
                sg = jax.nn.sigmoid(gates)
                tg = jnp.tanh(gates)
                i_g = sg[:, 0 * H:1 * H]   # input gate   (PyTorch order i,f,g,o)
                f_g = sg[:, 1 * H:2 * H]   # forget gate
                g_g = tg[:, 2 * H:3 * H]   # cell candidate
                o_g = sg[:, 3 * H:4 * H]   # output gate
                c_new = f_g * c + i_g * g_g
                h_new = o_g * jnp.tanh(c_new)
                h_all_scr[t] = h_new
                return h_new, c_new

            init = (jnp.zeros((B, H), jnp.float32),
                    jnp.zeros((B, H), jnp.float32))
            jax.lax.fori_loop(0, S, step, init, unroll=True)

            # TODO(synk): inter-layer dropout (self.dropout) applies only in
            # training mode; eval/predict semantics are reproduced here.

        # Bias-free FC head, written directly in batch_first (B, S, 2) order.
        wfc = wfc_ref[...]                                         # (H, 2) bf16
        for b in range(B):
            h_b = h_all_scr[:, b, :].astype(jnp.bfloat16)          # (S, H)
            out_ref[b] = jnp.dot(h_b, wfc,
                                 preferred_element_type=jnp.float32)

    return kernel


def np_lstm_small_forward(x_bsd, params):
    """Fused forward. x_bsd: (B, S, input_dim) f32 -> (B, S, 2) f32."""
    B, S, _ = x_bsd.shape
    lstm_params = params["lstm"]
    n_layers = len(lstm_params)
    H = lstm_params[0]["whh_t"].shape[0]

    def full_spec(a):
        nd = a.ndim
        return pl.BlockSpec(a.shape, lambda i, _nd=nd: (0,) * _nd)

    args = [x_bsd.astype(jnp.float32)]
    in_specs = [full_spec(args[0])]
    for lp in lstm_params:
        for name in ("wih_t", "whh_t", "bias"):
            args.append(lp[name])
            in_specs.append(full_spec(lp[name]))
    args.append(params["fc_t"])
    in_specs.append(full_spec(params["fc_t"]))

    kernel = _make_fused_kernel(B, S, H, n_layers)
    return pl.pallas_call(
        kernel,
        out_shape=jax.ShapeDtypeStruct((B, S, 2), jnp.float32),
        grid_spec=pltpu.PrefetchScalarGridSpec(
            num_scalar_prefetch=0,
            grid=(1,),
            in_specs=in_specs,
            out_specs=pl.BlockSpec((B, S, 2), lambda i: (0, 0, 0)),
            scratch_shapes=[
                pltpu.VMEM((S, B, 4 * H), jnp.float32),   # hoisted gate pre-acts
                pltpu.VMEM((S, B, H), jnp.float32),       # per-layer hidden states
            ],
        ),
        compiler_params=pltpu.CompilerParams(
            dimension_semantics=("arbitrary",),
        ),
    )(*args)


# ----------------------------------------------------------------------------
# Parameter init (deterministic, PyTorch-style U(-1/sqrt(H), 1/sqrt(H))).
# Weight matrices are stored transposed and cast to bf16 (MXU operand dtype);
# the folded bias stays in f32.
# ----------------------------------------------------------------------------
def init_params(key, input_dim, hidden_dim, n_layers):
    params = {"lstm": [], "fc_t": None}
    k = 1.0 / math.sqrt(hidden_dim)
    keys = jax.random.split(key, 4 * n_layers + 1)
    for layer in range(n_layers):
        din = input_dim if layer == 0 else hidden_dim
        kw = keys[4 * layer: 4 * layer + 4]
        w_ih = jax.random.uniform(kw[0], (4 * hidden_dim, din), jnp.float32, -k, k)
        w_hh = jax.random.uniform(kw[1], (4 * hidden_dim, hidden_dim), jnp.float32, -k, k)
        b_ih = jax.random.uniform(kw[2], (4 * hidden_dim,), jnp.float32, -k, k)
        b_hh = jax.random.uniform(kw[3], (4 * hidden_dim,), jnp.float32, -k, k)
        params["lstm"].append({
            "wih_t": w_ih.T.astype(jnp.bfloat16),                  # (din, 4H)
            "whh_t": w_hh.T.astype(jnp.bfloat16),                  # (H, 4H)
            "bias": (b_ih + b_hh).reshape(1, 4 * hidden_dim),      # f32 (1, 4H)
        })
    w_fc = jax.random.uniform(keys[-1], (2, hidden_dim), jnp.float32, -k, k)
    params["fc_t"] = w_fc.T.astype(jnp.bfloat16)                   # (H, 2)
    return params


# ----------------------------------------------------------------------------
# Pure-JAX reference mirroring the kernel's math (bf16 matmul operands,
# f32 accumulation and f32 gate/state math) for a correctness self-check.
# ----------------------------------------------------------------------------
def _reference_forward(x_bsd, params):
    B, S, _ = x_bsd.shape
    seq = x_bsd.astype(jnp.float32)                                # (B, S, Din)
    for lp in params["lstm"]:
        wih, whh, bias = lp["wih_t"], lp["whh_t"], lp["bias"]
        H = whh.shape[0]
        gx = (jnp.dot(seq.reshape(B * S, -1).astype(jnp.bfloat16), wih,
                      preferred_element_type=jnp.float32)
              .reshape(B, S, 4 * H) + bias)
        h = jnp.zeros((B, H), jnp.float32)
        c = jnp.zeros((B, H), jnp.float32)
        outs = []
        for t in range(S):
            gates = gx[:, t, :] + jnp.dot(h.astype(jnp.bfloat16), whh,
                                          preferred_element_type=jnp.float32)
            i = jax.nn.sigmoid(gates[:, 0 * H:1 * H])
            f = jax.nn.sigmoid(gates[:, 1 * H:2 * H])
            g = jnp.tanh(gates[:, 2 * H:3 * H])
            o = jax.nn.sigmoid(gates[:, 3 * H:4 * H])
            c = f * c + i * g
            h = o * jnp.tanh(c)
            outs.append(h)
        seq = jnp.stack(outs, axis=1)                              # (B, S, H)
    out = jnp.dot(seq.reshape(B * S, -1).astype(jnp.bfloat16), params["fc_t"],
                  preferred_element_type=jnp.float32)
    return out.reshape(B, S, 2)


if __name__ == "__main__":
    # Small, module-consistent shapes: batch=2, seq=8, input_dim=8,
    # hidden_dim=32, n_layers=2, dropout=0.1 (inactive in eval).
    B, S = 2, 8
    INPUT_DIM, HIDDEN_DIM, N_LAYERS = 8, 32, 2

    key = jax.random.PRNGKey(0)
    kx, kp = jax.random.split(key)
    x = jax.random.normal(kx, (B, S, INPUT_DIM), dtype=jnp.float32)
    params = init_params(kp, INPUT_DIM, HIDDEN_DIM, N_LAYERS)

    fwd = jax.jit(np_lstm_small_forward)
    out = jax.block_until_ready(fwd(x, params))
    assert out.shape == (B, S, 2), out.shape
    assert bool(jnp.all(jnp.isfinite(out)))

    ref = jax.block_until_ready(jax.jit(_reference_forward)(x, params))
    max_err = float(jnp.max(jnp.abs(out - ref)))
    assert max_err < 1e-2, f"kernel/reference mismatch: {max_err}"

    print("KERNEL_OK")
</pallas_src>

<mosaic_0001>
module attributes {stable_mosaic.version = 11 : i64} {
  func.func @kernel(%arg0: i32, %arg1: memref<2x8x8xf32, #tpu.memory_space<vmem>>, %arg2: memref<8x128xbf16, #tpu.memory_space<vmem>>, %arg3: memref<32x128xbf16, #tpu.memory_space<vmem>>, %arg4: memref<1x128xf32, #tpu.memory_space<vmem>>, %arg5: memref<32x128xbf16, #tpu.memory_space<vmem>>, %arg6: memref<32x128xbf16, #tpu.memory_space<vmem>>, %arg7: memref<1x128xf32, #tpu.memory_space<vmem>>, %arg8: memref<32x2xbf16, #tpu.memory_space<vmem>>, %arg9: memref<2x8x2xf32, #tpu.memory_space<vmem>>, %arg10: memref<8x2x128xf32, #tpu.memory_space<vmem>>, %arg11: memref<8x2x32xf32, #tpu.memory_space<vmem>>) attributes {dimension_semantics = [#tpu.dimension_semantics<arbitrary>], iteration_bounds = array<i64: 1>, scalar_prefetch = 0 : i64, scratch_operands = 2 : i64, tpu.core_type = #tpu.core_type<tc>, window_params = [{pipeline_mode = #tpu.pipeline_mode<synchronous>, transform_indices = @transform_0, window_bounds = array<i64: 2, 8, 8>}, {pipeline_mode = #tpu.pipeline_mode<synchronous>, transform_indices = @transform_1, window_bounds = array<i64: 8, 128>}, {pipeline_mode = #tpu.pipeline_mode<synchronous>, transform_indices = @transform_2, window_bounds = array<i64: 32, 128>}, {pipeline_mode = #tpu.pipeline_mode<synchronous>, transform_indices = @transform_3, window_bounds = array<i64: 1, 128>}, {pipeline_mode = #tpu.pipeline_mode<synchronous>, transform_indices = @transform_4, window_bounds = array<i64: 32, 128>}, {pipeline_mode = #tpu.pipeline_mode<synchronous>, transform_indices = @transform_5, window_bounds = array<i64: 32, 128>}, {pipeline_mode = #tpu.pipeline_mode<synchronous>, transform_indices = @transform_6, window_bounds = array<i64: 1, 128>}, {pipeline_mode = #tpu.pipeline_mode<synchronous>, transform_indices = @transform_7, window_bounds = array<i64: 32, 2>}, {pipeline_mode = #tpu.pipeline_mode<synchronous>, transform_indices = @transform_8, window_bounds = array<i64: 2, 8, 2>}]} {
    %c0 = arith.constant 0 : index
    %c0_0 = arith.constant 0 : index
    %0 = vector.load %arg2[%c0, %c0_0] : memref<8x128xbf16, #tpu.memory_space<vmem>>, vector<8x128xbf16>
    %c0_1 = arith.constant 0 : index
    %c0_2 = arith.constant 0 : index
    %1 = vector.load %arg3[%c0_1, %c0_2] : memref<32x128xbf16, #tpu.memory_space<vmem>>, vector<32x128xbf16>
    %c0_3 = arith.constant 0 : index
    %c0_4 = arith.constant 0 : index
    %2 = vector.load %arg4[%c0_3, %c0_4] : memref<1x128xf32, #tpu.memory_space<vmem>>, vector<1x128xf32>
    %c0_5 = arith.constant 0 : index
    %c0_6 = arith.constant 0 : index
    %c0_7 = arith.constant 0 : index
    %3 = vector.load %arg1[%c0_5, %c0_6, %c0_7] : memref<2x8x8xf32, #tpu.memory_space<vmem>>, vector<1x8x8xf32>
    %4 = vector.shape_cast %3 : vector<1x8x8xf32> to vector<8x8xf32>
    %5 = arith.truncf %4 : vector<8x8xf32> to vector<8x8xbf16>
    %cst = arith.constant dense<0.000000e+00> : vector<8x128xf32>
    %6 = tpu.matmul %5, %0, %cst {dimension_numbers = #tpu.dot_dimension_numbers<[1], [0], [0], [1], [0, 0, 1, 1], [], []>} : vector<8x8xbf16>, vector<8x128xbf16>, vector<8x128xf32> -> vector<8x128xf32>
    %7 = vector.broadcast %2 : vector<1x128xf32> to vector<8x128xf32>
    %8 = arith.addf %6, %7 : vector<8x128xf32>
    %c0_8 = arith.constant 0 : index
    %c0_9 = arith.constant 0 : index
    %c0_10 = arith.constant 0 : index
    %9 = vector.load %arg10[%c0_8, %c0_9, %c0_10] : memref<8x2x128xf32, #tpu.memory_space<vmem>>, vector<8x1x128xf32>
    %10 = vector.shape_cast %9 : vector<8x1x128xf32> to vector<8x128xf32>
    %11 = vector.shape_cast %8 : vector<8x128xf32> to vector<8x1x128xf32>
    tpu.vector_store %arg10[%c0_8, %c0_9, %c0_10], %11 {strides = array<i32>} : memref<8x2x128xf32, #tpu.memory_space<vmem>>, vector<8x1x128xf32>,
    %c1 = arith.constant 1 : index
    %c0_11 = arith.constant 0 : index
    %c0_12 = arith.constant 0 : index
    %12 = vector.load %arg1[%c1, %c0_11, %c0_12] : memref<2x8x8xf32, #tpu.memory_space<vmem>>, vector<1x8x8xf32>
    %13 = vector.shape_cast %12 : vector<1x8x8xf32> to vector<8x8xf32>
    %14 = arith.truncf %13 : vector<8x8xf32> to vector<8x8xbf16>
    %cst_13 = arith.constant dense<0.000000e+00> : vector<8x128xf32>
    %15 = tpu.matmul %14, %0, %cst_13 {dimension_numbers = #tpu.dot_dimension_numbers<[1], [0], [0], [1], [0, 0, 1, 1], [], []>} : vector<8x8xbf16>, vector<8x128xbf16>, vector<8x128xf32> -> vector<8x128xf32>
    %16 = vector.broadcast %2 : vector<1x128xf32> to vector<8x128xf32>
    %17 = arith.addf %15, %16 : vector<8x128xf32>
    %c0_14 = arith.constant 0 : index
    %c1_15 = arith.constant 1 : index
    %c0_16 = arith.constant 0 : index
    %18 = vector.load %arg10[%c0_14, %c1_15, %c0_16] : memref<8x2x128xf32, #tpu.memory_space<vmem>>, vector<8x1x128xf32>
    %19 = vector.shape_cast %18 : vector<8x1x128xf32> to vector<8x128xf32>
    %20 = vector.shape_cast %17 : vector<8x128xf32> to vector<8x1x128xf32>
    tpu.vector_store %arg10[%c0_14, %c1_15, %c0_16], %20 {strides = array<i32>} : memref<8x2x128xf32, #tpu.memory_space<vmem>>, vector<8x1x128xf32>,
    %cst_17 = arith.constant 0.000000e+00 : f32
    %21 = vector.broadcast %cst_17 : f32 to vector<2x32xf32>
    %cst_18 = arith.constant 0.000000e+00 : f32
    %22 = vector.broadcast %cst_18 : f32 to vector<2x32xf32>
    %c0_i32 = arith.constant 0 : i32
    %23 = arith.index_cast %c0_i32 : i32 to index
    %c0_19 = arith.constant 0 : index
    %c0_20 = arith.constant 0 : index
    %24 = vector.load %arg10[%23, %c0_19, %c0_20] : memref<8x2x128xf32, #tpu.memory_space<vmem>>, vector<1x2x128xf32>
    %25 = vector.shape_cast %24 : vector<1x2x128xf32> to vector<2x128xf32>
    %26 = arith.truncf %21 : vector<2x32xf32> to vector<2x32xbf16>
    %cst_21 = arith.constant dense<0.000000e+00> : vector<2x128xf32>
    %27 = tpu.matmul %26, %1, %cst_21 {dimension_numbers = #tpu.dot_dimension_numbers<[1], [0], [0], [1], [0, 0, 1, 1], [], []>} : vector<2x32xbf16>, vector<32x128xbf16>, vector<2x128xf32> -> vector<2x128xf32>
    %28 = arith.addf %25, %27 : vector<2x128xf32>
    %29 = arith.negf %28 : vector<2x128xf32>
    %30 = math.exp %29 : vector<2x128xf32>
    %cst_22 = arith.constant 1.000000e+00 : f32
    %31 = vector.broadcast %cst_22 : f32 to vector<2x128xf32>
    %32 = arith.addf %31, %30 : vector<2x128xf32>
    %33 = arith.divf %31, %32 : vector<2x128xf32>
    %34 = math.tanh %28 : vector<2x128xf32>
    %35 = vector.extract_strided_slice %33 {offsets = [0, 0], sizes = [2, 32], strides = [1, 1]} : vector<2x128xf32> to vector<2x32xf32>
    %36 = vector.extract_strided_slice %33 {offsets = [0, 32], sizes = [2, 32], strides = [1, 1]} : vector<2x128xf32> to vector<2x32xf32>
    %37 = vector.extract_strided_slice %34 {offsets = [0, 64], sizes = [2, 32], strides = [1, 1]} : vector<2x128xf32> to vector<2x32xf32>
    %38 = vector.extract_strided_slice %33 {offsets = [0, 96], sizes = [2, 32], strides = [1, 1]} : vector<2x128xf32> to vector<2x32xf32>
    %39 = arith.mulf %36, %22 : vector<2x32xf32>
    %40 = arith.mulf %35, %37 : vector<2x32xf32>
    %41 = arith.addf %39, %40 : vector<2x32xf32>
    %42 = math.tanh %41 : vector<2x32xf32>
    %43 = arith.mulf %38, %42 : vector<2x32xf32>
    %44 = arith.index_cast %c0_i32 : i32 to index
    %c0_23 = arith.constant 0 : index
    %c0_24 = arith.constant 0 : index
    %45 = vector.load %arg11[%44, %c0_23, %c0_24] : memref<8x2x32xf32, #tpu.memory_space<vmem>>, vector<1x2x32xf32>
    %46 = vector.shape_cast %45 : vector<1x2x32xf32> to vector<2x32xf32>
    %47 = vector.shape_cast %43 : vector<2x32xf32> to vector<1x2x32xf32>
    tpu.vector_store %arg11[%44, %c0_23, %c0_24], %47 {strides = array<i32>} : memref<8x2x32xf32, #tpu.memory_space<vmem>>, vector<1x2x32xf32>,
    %c1_i32 = arith.constant 1 : i32
    %48 = arith.index_cast %c1_i32 : i32 to index
    %c0_25 = arith.constant 0 : index
    %c0_26 = arith.constant 0 : index
    %49 = vector.load %arg10[%48, %c0_25, %c0_26] : memref<8x2x128xf32, #tpu.memory_space<vmem>>, vector<1x2x128xf32>
    %50 = vector.shape_cast %49 : vector<1x2x128xf32> to vector<2x128xf32>
    %51 = arith.truncf %43 : vector<2x32xf32> to vector<2x32xbf16>
    %cst_27 = arith.constant dense<0.000000e+00> : vector<2x128xf32>
    %52 = tpu.matmul %51, %1, %cst_27 {dimension_numbers = #tpu.dot_dimension_numbers<[1], [0], [0], [1], [0, 0, 1, 1], [], []>} : vector<2x32xbf16>, vector<32x128xbf16>, vector<2x128xf32> -> vector<2x128xf32>
    %53 = arith.addf %50, %52 : vector<2x128xf32>
    %54 = arith.negf %53 : vector<2x128xf32>
    %55 = math.exp %54 : vector<2x128xf32>
    %cst_28 = arith.constant 1.000000e+00 : f32
    %56 = vector.broadcast %cst_28 : f32 to vector<2x128xf32>
    %57 = arith.addf %56, %55 : vector<2x128xf32>
    %58 = arith.divf %56, %57 : vector<2x128xf32>
    %59 = math.tanh %53 : vector<2x128xf32>
    %60 = vector.extract_strided_slice %58 {offsets = [0, 0], sizes = [2, 32], strides = [1, 1]} : vector<2x128xf32> to vector<2x32xf32>
    %61 = vector.extract_strided_slice %58 {offsets = [0, 32], sizes = [2, 32], strides = [1, 1]} : vector<2x128xf32> to vector<2x32xf32>
    %62 = vector.extract_strided_slice %59 {offsets = [0, 64], sizes = [2, 32], strides = [1, 1]} : vector<2x128xf32> to vector<2x32xf32>
    %63 = vector.extract_strided_slice %58 {offsets = [0, 96], sizes = [2, 32], strides = [1, 1]} : vector<2x128xf32> to vector<2x32xf32>
    %64 = arith.mulf %61, %41 : vector<2x32xf32>
    %65 = arith.mulf %60, %62 : vector<2x32xf32>
    %66 = arith.addf %64, %65 : vector<2x32xf32>
    %67 = math.tanh %66 : vector<2x32xf32>
    %68 = arith.mulf %63, %67 : vector<2x32xf32>
    %69 = arith.index_cast %c1_i32 : i32 to index
    %c0_29 = arith.constant 0 : index
    %c0_30 = arith.constant 0 : index
    %70 = vector.load %arg11[%69, %c0_29, %c0_30] : memref<8x2x32xf32, #tpu.memory_space<vmem>>, vector<1x2x32xf32>
    %71 = vector.shape_cast %70 : vector<1x2x32xf32> to vector<2x32xf32>
    %72 = vector.shape_cast %68 : vector<2x32xf32> to vector<1x2x32xf32>
    tpu.vector_store %arg11[%69, %c0_29, %c0_30], %72 {strides = array<i32>} : memref<8x2x32xf32, #tpu.memory_space<vmem>>, vector<1x2x32xf32>,
    %c2_i32 = arith.constant 2 : i32
    %73 = arith.index_cast %c2_i32 : i32 to index
    %c0_31 = arith.constant 0 : index
    %c0_32 = arith.constant 0 : index
    %74 = vector.load %arg10[%73, %c0_31, %c0_32] : memref<8x2x128xf32, #tpu.memory_space<vmem>>, vector<1x2x128xf32>
    %75 = vector.shape_cast %74 : vector<1x2x128xf32> to vector<2x128xf32>
    %76 = arith.truncf %68 : vector<2x32xf32> to vector<2x32xbf16>
    %cst_33 = arith.constant dense<0.000000e+00> : vector<2x128xf32>
    %77 = tpu.matmul %76, %1, %cst_33 {dimension_numbers = #tpu.dot_dimension_numbers<[1], [0], [0], [1], [0, 0, 1, 1], [], []>} : vector<2x32xbf16>, vector<32x128xbf16>, vector<2x128xf32> -> vector<2x128xf32>
    %78 = arith.addf %75, %77 : vector<2x128xf32>
    %79 = arith.negf %78 : vector<2x128xf32>
    %80 = math.exp %79 : vector<2x128xf32>
    %cst_34 = arith.constant 1.000000e+00 : f32
    %81 = vector.broadcast %cst_34 : f32 to vector<2x128xf32>
    %82 = arith.addf %81, %80 : vector<2x128xf32>
    %83 = arith.divf %81, %82 : vector<2x128xf32>
    %84 = math.tanh %78 : vector<2x128xf32>
    %85 = vector.extract_strided_slice %83 {offsets = [0, 0], sizes = [2, 32], strides = [1, 1]} : vector<2x128xf32> to vector<2x32xf32>
    %86 = vector.extract_strided_slice %83 {offsets = [0, 32], sizes = [2, 32], strides = [1, 1]} : vector<2x128xf32> to vector<2x32xf32>
    %87 = vector.extract_strided_slice %84 {offsets = [0, 64], sizes = [2, 32], strides = [1, 1]} : vector<2x128xf32> to vector<2x32xf32>
    %88 = vector.extract_strided_slice %83 {offsets = [0, 96], sizes = [2, 32], strides = [1, 1]} : vector<2x128xf32> to vector<2x32xf32>
    %89 = arith.mulf %86, %66 : vector<2x32xf32>
    %90 = arith.mulf %85, %87 : vector<2x32xf32>
    %91 = arith.addf %89, %90 : vector<2x32xf32>
    %92 = math.tanh %91 : vector<2x32xf32>
    %93 = arith.mulf %88, %92 : vector<2x32xf32>
    %94 = arith.index_cast %c2_i32 : i32 to index
    %c0_35 = arith.constant 0 : index
    %c0_36 = arith.constant 0 : index
    %95 = vector.load %arg11[%94, %c0_35, %c0_36] : memref<8x2x32xf32, #tpu.memory_space<vmem>>, vector<1x2x32xf32>
    %96 = vector.shape_cast %95 : vector<1x2x32xf32> to vector<2x32xf32>
    %97 = vector.shape_cast %93 : vector<2x32xf32> to vector<1x2x32xf32>
    tpu.vector_store %arg11[%94, %c0_35, %c0_36], %97 {strides = array<i32>} : memref<8x2x32xf32, #tpu.memory_space<vmem>>, vector<1x2x32xf32>,
    %c3_i32 = arith.constant 3 : i32
    %98 = arith.index_cast %c3_i32 : i32 to index
    %c0_37 = arith.constant 0 : index
    %c0_38 = arith.constant 0 : index
    %99 = vector.load %arg10[%98, %c0_37, %c0_38] : memref<8x2x128xf32, #tpu.memory_space<vmem>>, vector<1x2x128xf32>
    %100 = vector.shape_cast %99 : vector<1x2x128xf32> to vector<2x128xf32>
    %101 = arith.truncf %93 : vector<2x32xf32> to vector<2x32xbf16>
    %cst_39 = arith.constant dense<0.000000e+00> : vector<2x128xf32>
    %102 = tpu.matmul %101, %1, %cst_39 {dimension_numbers = #tpu.dot_dimension_numbers<[1], [0], [0], [1], [0, 0, 1, 1], [], []>} : vector<2x32xbf16>, vector<32x128xbf16>, vector<2x128xf32> -> vector<2x128xf32>
    %103 = arith.addf %100, %102 : vector<2x128xf32>
    %104 = arith.negf %103 : vector<2x128xf32>
    %105 = math.exp %104 : vector<2x128xf32>
    %cst_40 = arith.constant 1.000000e+00 : f32
    %106 = vector.broadcast %cst_40 : f32 to vector<2x128xf32>
    %107 = arith.addf %106, %105 : vector<2x128xf32>
    %108 = arith.divf %106, %107 : vector<2x128xf32>
    %109 = math.tanh %103 : vector<2x128xf32>
    %110 = vector.extract_strided_slice %108 {offsets = [0, 0], sizes = [2, 32], strides = [1, 1]} : vector<2x128xf32> to vector<2x32xf32>
    %111 = vector.extract_strided_slice %108 {offsets = [0, 32], sizes = [2, 32], strides = [1, 1]} : vector<2x128xf32> to vector<2x32xf32>
    %112 = vector.extract_strided_slice %109 {offsets = [0, 64], sizes = [2, 32], strides = [1, 1]} : vector<2x128xf32> to vector<2x32xf32>
    %113 = vector.extract_strided_slice %108 {offsets = [0, 96], sizes = [2, 32], strides = [1, 1]} : vector<2x128xf32> to vector<2x32xf32>
    %114 = arith.mulf %111, %91 : vector<2x32xf32>
    %115 = arith.mulf %110, %112 : vector<2x32xf32>
    %116 = arith.addf %114, %115 : vector<2x32xf32>
    %117 = math.tanh %116 : vector<2x32xf32>
    %118 = arith.mulf %113, %117 : vector<2x32xf32>
    %119 = arith.index_cast %c3_i32 : i32 to index
    %c0_41 = arith.constant 0 : index
    %c0_42 = arith.constant 0 : index
    %120 = vector.load %arg11[%119, %c0_41, %c0_42] : memref<8x2x32xf32, #tpu.memory_space<vmem>>, vector<1x2x32xf32>
    %121 = vector.shape_cast %120 : vector<1x2x32xf32> to vector<2x32xf32>
    %122 = vector.shape_cast %118 : vector<2x32xf32> to vector<1x2x32xf32>
    tpu.vector_store %arg11[%119, %c0_41, %c0_42], %122 {strides = array<i32>} : memref<8x2x32xf32, #tpu.memory_space<vmem>>, vector<1x2x32xf32>,
    %c4_i32 = arith.constant 4 : i32
    %123 = arith.index_cast %c4_i32 : i32 to index
    %c0_43 = arith.constant 0 : index
    %c0_44 = arith.constant 0 : index
    %124 = vector.load %arg10[%123, %c0_43, %c0_44] : memref<8x2x128xf32, #tpu.memory_space<vmem>>, vector<1x2x128xf32>
    %125 = vector.shape_cast %124 : vector<1x2x128xf32> to vector<2x128xf32>
    %126 = arith.truncf %118 : vector<2x32xf32> to vector<2x32xbf16>
    %cst_45 = arith.constant dense<0.000000e+00> : vector<2x128xf32>
    %127 = tpu.matmul %126, %1, %cst_45 {dimension_numbers = #tpu.dot_dimension_numbers<[1], [0], [0], [1], [0, 0, 1, 1], [], []>} : vector<2x32xbf16>, vector<32x128xbf16>, vector<2x128xf32> -> vector<2x128xf32>
    %128 = arith.addf %125, %127 : vector<2x128xf32>
    %129 = arith.negf %128 : vector<2x128xf32>
    %130 = math.exp %129 : vector<2x128xf32>
    %cst_46 = arith.constant 1.000000e+00 : f32
    %131 = vector.broadcast %cst_46 : f32 to vector<2x128xf32>
    %132 = arith.addf %131, %130 : vector<2x128xf32>
    %133 = arith.divf %131, %132 : vector<2x128xf32>
    %134 = math.tanh %128 : vector<2x128xf32>
    %135 = vector.extract_strided_slice %133 {offsets = [0, 0], sizes = [2, 32], strides = [1, 1]} : vector<2x128xf32> to vector<2x32xf32>
    %136 = vector.extract_strided_slice %133 {offsets = [0, 32], sizes = [2, 32], strides = [1, 1]} : vector<2x128xf32> to vector<2x32xf32>
    %137 = vector.extract_strided_slice %134 {offsets = [0, 64], sizes = [2, 32], strides = [1, 1]} : vector<2x128xf32> to vector<2x32xf32>
    %138 = vector.extract_strided_slice %133 {offsets = [0, 96], sizes = [2, 32], strides = [1, 1]} : vector<2x128xf32> to vector<2x32xf32>
    %139 = arith.mulf %136, %116 : vector<2x32xf32>
    %140 = arith.mulf %135, %137 : vector<2x32xf32>
    %141 = arith.addf %139, %140 : vector<2x32xf32>
    %142 = math.tanh %141 : vector<2x32xf32>
    %143 = arith.mulf %138, %142 : vector<2x32xf32>
    %144 = arith.index_cast %c4_i32 : i32 to index
    %c0_47 = arith.constant 0 : index
    %c0_48 = arith.constant 0 : index
    %145 = vector.load %arg11[%144, %c0_47, %c0_48] : memref<8x2x32xf32, #tpu.memory_space<vmem>>, vector<1x2x32xf32>
    %146 = vector.shape_cast %145 : vector<1x2x32xf32> to vector<2x32xf32>
    %147 = vector.shape_cast %143 : vector<2x32xf32> to vector<1x2x32xf32>
    tpu.vector_store %arg11[%144, %c0_47, %c0_48], %147 {strides = array<i32>} : memref<8x2x32xf32, #tpu.memory_space<vmem>>, vector<1x2x32xf32>,
    %c5_i32 = arith.constant 5 : i32
    %148 = arith.index_cast %c5_i32 : i32 to index
    %c0_49 = arith.constant 0 : index
    %c0_50 = arith.constant 0 : index
    %149 = vector.load %arg10[%148, %c0_49, %c0_50] : memref<8x2x128xf32, #tpu.memory_space<vmem>>, vector<1x2x128xf32>
    %150 = vector.shape_cast %149 : vector<1x2x128xf32> to vector<2x128xf32>
    %151 = arith.truncf %143 : vector<2x32xf32> to vector<2x32xbf16>
    %cst_51 = arith.constant dense<0.000000e+00> : vector<2x128xf32>
    %152 = tpu.matmul %151, %1, %cst_51 {dimension_numbers = #tpu.dot_dimension_numbers<[1], [0], [0], [1], [0, 0, 1, 1], [], []>} : vector<2x32xbf16>, vector<32x128xbf16>, vector<2x128xf32> -> vector<2x128xf32>
    %153 = arith.addf %150, %152 : vector<2x128xf32>
    %154 = arith.negf %153 : vector<2x128xf32>
    %155 = math.exp %154 : vector<2x128xf32>
    %cst_52 = arith.constant 1.000000e+00 : f32
    %156 = vector.broadcast %cst_52 : f32 to vector<2x128xf32>
    %157 = arith.addf %156, %155 : vector<2x128xf32>
    %158 = arith.divf %156, %157 : vector<2x128xf32>
    %159 = math.tanh %153 : vector<2x128xf32>
    %160 = vector.extract_strided_slice %158 {offsets = [0, 0], sizes = [2, 32], strides = [1, 1]} : vector<2x128xf32> to vector<2x32xf32>
    %161 = vector.extract_strided_slice %158 {offsets = [0, 32], sizes = [2, 32], strides = [1, 1]} : vector<2x128xf32> to vector<2x32xf32>
    %162 = vector.extract_strided_slice %159 {offsets = [0, 64], sizes = [2, 32], strides = [1, 1]} : vector<2x128xf32> to vector<2x32xf32>
    %163 = vector.extract_strided_slice %158 {offsets = [0, 96], sizes = [2, 32], strides = [1, 1]} : vector<2x128xf32> to vector<2x32xf32>
    %164 = arith.mulf %161, %141 : vector<2x32xf32>
    %165 = arith.mulf %160, %162 : vector<2x32xf32>
    %166 = arith.addf %164, %165 : vector<2x32xf32>
    %167 = math.tanh %166 : vector<2x32xf32>
    %168 = arith.mulf %163, %167 : vector<2x32xf32>
    %169 = arith.index_cast %c5_i32 : i32 to index
    %c0_53 = arith.constant 0 : index
    %c0_54 = arith.constant 0 : index
    %170 = vector.load %arg11[%169, %c0_53, %c0_54] : memref<8x2x32xf32, #tpu.memory_space<vmem>>, vector<1x2x32xf32>
    %171 = vector.shape_cast %170 : vector<1x2x32xf32> to vector<2x32xf32>
    %172 = vector.shape_cast %168 : vector<2x32xf32> to vector<1x2x32xf32>
    tpu.vector_store %arg11[%169, %c0_53, %c0_54], %172 {strides = array<i32>} : memref<8x2x32xf32, #tpu.memory_space<vmem>>, vector<1x2x32xf32>,
    %c6_i32 = arith.constant 6 : i32
    %173 = arith.index_cast %c6_i32 : i32 to index
    %c0_55 = arith.constant 0 : index
    %c0_56 = arith.constant 0 : index
    %174 = vector.load %arg10[%173, %c0_55, %c0_56] : memref<8x2x128xf32, #tpu.memory_space<vmem>>, vector<1x2x128xf32>
    %175 = vector.shape_cast %174 : vector<1x2x128xf32> to vector<2x128xf32>
    %176 = arith.truncf %168 : vector<2x32xf32> to vector<2x32xbf16>
    %cst_57 = arith.constant dense<0.000000e+00> : vector<2x128xf32>
    %177 = tpu.matmul %176, %1, %cst_57 {dimension_numbers = #tpu.dot_dimension_numbers<[1], [0], [0], [1], [0, 0, 1, 1], [], []>} : vector<2x32xbf16>, vector<32x128xbf16>, vector<2x128xf32> -> vector<2x128xf32>
    %178 = arith.addf %175, %177 : vector<2x128xf32>
    %179 = arith.negf %178 : vector<2x128xf32>
    %180 = math.exp %179 : vector<2x128xf32>
    %cst_58 = arith.constant 1.000000e+00 : f32
    %181 = vector.broadcast %cst_58 : f32 to vector<2x128xf32>
    %182 = arith.addf %181, %180 : vector<2x128xf32>
    %183 = arith.divf %181, %182 : vector<2x128xf32>
    %184 = math.tanh %178 : vector<2x128xf32>
    %185 = vector.extract_strided_slice %183 {offsets = [0, 0], sizes = [2, 32], strides = [1, 1]} : vector<2x128xf32> to vector<2x32xf32>
    %186 = vector.extract_strided_slice %183 {offsets = [0, 32], sizes = [2, 32], strides = [1, 1]} : vector<2x128xf32> to vector<2x32xf32>
    %187 = vector.extract_strided_slice %184 {offsets = [0, 64], sizes = [2, 32], strides = [1, 1]} : vector<2x128xf32> to vector<2x32xf32>
    %188 = vector.extract_strided_slice %183 {offsets = [0, 96], sizes = [2, 32], strides = [1, 1]} : vector<2x128xf32> to vector<2x32xf32>
    %189 = arith.mulf %186, %166 : vector<2x32xf32>
    %190 = arith.mulf %185, %187 : vector<2x32xf32>
    %191 = arith.addf %189, %190 : vector<2x32xf32>
    %192 = math.tanh %191 : vector<2x32xf32>
    %193 = arith.mulf %188, %192 : vector<2x32xf32>
    %194 = arith.index_cast %c6_i32 : i32 to index
    %c0_59 = arith.constant 0 : index
    %c0_60 = arith.constant 0 : index
    %195 = vector.load %arg11[%194, %c0_59, %c0_60] : memref<8x2x32xf32, #tpu.memory_space<vmem>>, vector<1x2x32xf32>
    %196 = vector.shape_cast %195 : vector<1x2x32xf32> to vector<2x32xf32>
    %197 = vector.shape_cast %193 : vector<2x32xf32> to vector<1x2x32xf32>
    tpu.vector_store %arg11[%194, %c0_59, %c0_60], %197 {strides = array<i32>} : memref<8x2x32xf32, #tpu.memory_space<vmem>>, vector<1x2x32xf32>,
    %c7_i32 = arith.constant 7 : i32
    %198 = arith.index_cast %c7_i32 : i32 to index
    %c0_61 = arith.constant 0 : index
    %c0_62 = arith.constant 0 : index
    %199 = vector.load %arg10[%198, %c0_61, %c0_62] : memref<8x2x128xf32, #tpu.memory_space<vmem>>, vector<1x2x128xf32>
    %200 = vector.shape_cast %199 : vector<1x2x128xf32> to vector<2x128xf32>
    %201 = arith.truncf %193 : vector<2x32xf32> to vector<2x32xbf16>
    %cst_63 = arith.constant dense<0.000000e+00> : vector<2x128xf32>
    %202 = tpu.matmul %201, %1, %cst_63 {dimension_numbers = #tpu.dot_dimension_numbers<[1], [0], [0], [1], [0, 0, 1, 1], [], []>} : vector<2x32xbf16>, vector<32x128xbf16>, vector<2x128xf32> -> vector<2x128xf32>
    %203 = arith.addf %200, %202 : vector<2x128xf32>
    %204 = arith.negf %203 : vector<2x128xf32>
    %205 = math.exp %204 : vector<2x128xf32>
    %cst_64 = arith.constant 1.000000e+00 : f32
    %206 = vector.broadcast %cst_64 : f32 to vector<2x128xf32>
    %207 = arith.addf %206, %205 : vector<2x128xf32>
    %208 = arith.divf %206, %207 : vector<2x128xf32>
    %209 = math.tanh %203 : vector<2x128xf32>
    %210 = vector.extract_strided_slice %208 {offsets = [0, 0], sizes = [2, 32], strides = [1, 1]} : vector<2x128xf32> to vector<2x32xf32>
    %211 = vector.extract_strided_slice %208 {offsets = [0, 32], sizes = [2, 32], strides = [1, 1]} : vector<2x128xf32> to vector<2x32xf32>
    %212 = vector.extract_strided_slice %209 {offsets = [0, 64], sizes = [2, 32], strides = [1, 1]} : vector<2x128xf32> to vector<2x32xf32>
    %213 = vector.extract_strided_slice %208 {offsets = [0, 96], sizes = [2, 32], strides = [1, 1]} : vector<2x128xf32> to vector<2x32xf32>
    %214 = arith.mulf %211, %191 : vector<2x32xf32>
    %215 = arith.mulf %210, %212 : vector<2x32xf32>
    %216 = arith.addf %214, %215 : vector<2x32xf32>
    %217 = math.tanh %216 : vector<2x32xf32>
    %218 = arith.mulf %213, %217 : vector<2x32xf32>
    %219 = arith.index_cast %c7_i32 : i32 to index
    %c0_65 = arith.constant 0 : index
    %c0_66 = arith.constant 0 : index
    %220 = vector.load %arg11[%219, %c0_65, %c0_66] : memref<8x2x32xf32, #tpu.memory_space<vmem>>, vector<1x2x32xf32>
    %221 = vector.shape_cast %220 : vector<1x2x32xf32> to vector<2x32xf32>
    %222 = vector.shape_cast %218 : vector<2x32xf32> to vector<1x2x32xf32>
    tpu.vector_store %arg11[%219, %c0_65, %c0_66], %222 {strides = array<i32>} : memref<8x2x32xf32, #tpu.memory_space<vmem>>, vector<1x2x32xf32>,
    %c8_i32 = arith.constant 8 : i32
    %c0_67 = arith.constant 0 : index
    %c0_68 = arith.constant 0 : index
    %223 = vector.load %arg5[%c0_67, %c0_68] : memref<32x128xbf16, #tpu.memory_space<vmem>>, vector<32x128xbf16>
    %c0_69 = arith.constant 0 : index
    %c0_70 = arith.constant 0 : index
    %224 = vector.load %arg6[%c0_69, %c0_70] : memref<32x128xbf16, #tpu.memory_space<vmem>>, vector<32x128xbf16>
    %c0_71 = arith.constant 0 : index
    %c0_72 = arith.constant 0 : index
    %225 = vector.load %arg7[%c0_71, %c0_72] : memref<1x128xf32, #tpu.memory_space<vmem>>, vector<1x128xf32>
    %c0_73 = arith.constant 0 : index
    %c0_74 = arith.constant 0 : index
    %c0_75 = arith.constant 0 : index
    %226 = vector.load %arg11[%c0_73, %c0_74, %c0_75] : memref<8x2x32xf32, #tpu.memory_space<vmem>>, vector<8x1x32xf32>
    %227 = vector.shape_cast %226 : vector<8x1x32xf32> to vector<8x32xf32>
    %228 = arith.truncf %227 : vector<8x32xf32> to vector<8x32xbf16>
    %cst_76 = arith.constant dense<0.000000e+00> : vector<8x128xf32>
    %229 = tpu.matmul %228, %223, %cst_76 {dimension_numbers = #tpu.dot_dimension_numbers<[1], [0], [0], [1], [0, 0, 1, 1], [], []>} : vector<8x32xbf16>, vector<32x128xbf16>, vector<8x128xf32> -> vector<8x128xf32>
    %230 = vector.broadcast %225 : vector<1x128xf32> to vector<8x128xf32>
    %231 = arith.addf %229, %230 : vector<8x128xf32>
    %c0_77 = arith.constant 0 : index
    %c0_78 = arith.constant 0 : index
    %c0_79 = arith.constant 0 : index
    %232 = vector.load %arg10[%c0_77, %c0_78, %c0_79] : memref<8x2x128xf32, #tpu.memory_space<vmem>>, vector<8x1x128xf32>
    %233 = vector.shape_cast %232 : vector<8x1x128xf32> to vector<8x128xf32>
    %234 = vector.shape_cast %231 : vector<8x128xf32> to vector<8x1x128xf32>
    tpu.vector_store %arg10[%c0_77, %c0_78, %c0_79], %234 {strides = array<i32>} : memref<8x2x128xf32, #tpu.memory_space<vmem>>, vector<8x1x128xf32>,
    %c0_80 = arith.constant 0 : index
    %c1_81 = arith.constant 1 : index
    %c0_82 = arith.constant 0 : index
    %235 = vector.load %arg11[%c0_80, %c1_81, %c0_82] : memref<8x2x32xf32, #tpu.memory_space<vmem>>, vector<8x1x32xf32>
    %236 = vector.shape_cast %235 : vector<8x1x32xf32> to vector<8x32xf32>
    %237 = arith.truncf %236 : vector<8x32xf32> to vector<8x32xbf16>
    %cst_83 = arith.constant dense<0.000000e+00> : vector<8x128xf32>
    %238 = tpu.matmul %237, %223, %cst_83 {dimension_numbers = #tpu.dot_dimension_numbers<[1], [0], [0], [1], [0, 0, 1, 1], [], []>} : vector<8x32xbf16>, vector<32x128xbf16>, vector<8x128xf32> -> vector<8x128xf32>
    %239 = vector.broadcast %225 : vector<1x128xf32> to vector<8x128xf32>
    %240 = arith.addf %238, %239 : vector<8x128xf32>
    %c0_84 = arith.constant 0 : index
    %c1_85 = arith.constant 1 : index
    %c0_86 = arith.constant 0 : index
    %241 = vector.load %arg10[%c0_84, %c1_85, %c0_86] : memref<8x2x128xf32, #tpu.memory_space<vmem>>, vector<8x1x128xf32>
    %242 = vector.shape_cast %241 : vector<8x1x128xf32> to vector<8x128xf32>
    %243 = vector.shape_cast %240 : vector<8x128xf32> to vector<8x1x128xf32>
    tpu.vector_store %arg10[%c0_84, %c1_85, %c0_86], %243 {strides = array<i32>} : memref<8x2x128xf32, #tpu.memory_space<vmem>>, vector<8x1x128xf32>,
    %cst_87 = arith.constant 0.000000e+00 : f32
    %244 = vector.broadcast %cst_87 : f32 to vector<2x32xf32>
    %cst_88 = arith.constant 0.000000e+00 : f32
    %245 = vector.broadcast %cst_88 : f32 to vector<2x32xf32>
    %c0_i32_89 = arith.constant 0 : i32
    %246 = arith.index_cast %c0_i32_89 : i32 to index
    %c0_90 = arith.constant 0 : index
    %c0_91 = arith.constant 0 : index
    %247 = vector.load %arg10[%246, %c0_90, %c0_91] : memref<8x2x128xf32, #tpu.memory_space<vmem>>, vector<1x2x128xf32>
    %248 = vector.shape_cast %247 : vector<1x2x128xf32> to vector<2x128xf32>
    %249 = arith.truncf %244 : vector<2x32xf32> to vector<2x32xbf16>
    %cst_92 = arith.constant dense<0.000000e+00> : vector<2x128xf32>
    %250 = tpu.matmul %249, %224, %cst_92 {dimension_numbers = #tpu.dot_dimension_numbers<[1], [0], [0], [1], [0, 0, 1, 1], [], []>} : vector<2x32xbf16>, vector<32x128xbf16>, vector<2x128xf32> -> vector<2x128xf32>
    %251 = arith.addf %248, %250 : vector<2x128xf32>
    %252 = arith.negf %251 : vector<2x128xf32>
    %253 = math.exp %252 : vector<2x128xf32>
    %cst_93 = arith.constant 1.000000e+00 : f32
    %254 = vector.broadcast %cst_93 : f32 to vector<2x128xf32>
    %255 = arith.addf %254, %253 : vector<2x128xf32>
    %256 = arith.divf %254, %255 : vector<2x128xf32>
    %257 = math.tanh %251 : vector<2x128xf32>
    %258 = vector.extract_strided_slice %256 {offsets = [0, 0], sizes = [2, 32], strides = [1, 1]} : vector<2x128xf32> to vector<2x32xf32>
    %259 = vector.extract_strided_slice %256 {offsets = [0, 32], sizes = [2, 32], strides = [1, 1]} : vector<2x128xf32> to vector<2x32xf32>
    %260 = vector.extract_strided_slice %257 {offsets = [0, 64], sizes = [2, 32], strides = [1, 1]} : vector<2x128xf32> to vector<2x32xf32>
    %261 = vector.extract_strided_slice %256 {offsets = [0, 96], sizes = [2, 32], strides = [1, 1]} : vector<2x128xf32> to vector<2x32xf32>
    %262 = arith.mulf %259, %245 : vector<2x32xf32>
    %263 = arith.mulf %258, %260 : vector<2x32xf32>
    %264 = arith.addf %262, %263 : vector<2x32xf32>
    %265 = math.tanh %264 : vector<2x32xf32>
    %266 = arith.mulf %261, %265 : vector<2x32xf32>
    %267 = arith.index_cast %c0_i32_89 : i32 to index
    %c0_94 = arith.constant 0 : index
    %c0_95 = arith.constant 0 : index
    %268 = vector.load %arg11[%267, %c0_94, %c0_95] : memref<8x2x32xf32, #tpu.memory_space<vmem>>, vector<1x2x32xf32>
    %269 = vector.shape_cast %268 : vector<1x2x32xf32> to vector<2x32xf32>
    %270 = vector.shape_cast %266 : vector<2x32xf32> to vector<1x2x32xf32>
    tpu.vector_store %arg11[%267, %c0_94, %c0_95], %270 {strides = array<i32>} : memref<8x2x32xf32, #tpu.memory_space<vmem>>, vector<1x2x32xf32>,
    %c1_i32_96 = arith.constant 1 : i32
    %271 = arith.index_cast %c1_i32_96 : i32 to index
    %c0_97 = arith.constant 0 : index
    %c0_98 = arith.constant 0 : index
    %272 = vector.load %arg10[%271, %c0_97, %c0_98] : memref<8x2x128xf32, #tpu.memory_space<vmem>>, vector<1x2x128xf32>
    %273 = vector.shape_cast %272 : vector<1x2x128xf32> to vector<2x128xf32>
    %274 = arith.truncf %266 : vector<2x32xf32> to vector<2x32xbf16>
    %cst_99 = arith.constant dense<0.000000e+00> : vector<2x128xf32>
    %275 = tpu.matmul %274, %224, %cst_99 {dimension_numbers = #tpu.dot_dimension_numbers<[1], [0], [0], [1], [0, 0, 1, 1], [], []>} : vector<2x32xbf16>, vector<32x128xbf16>, vector<2x128xf32> -> vector<2x128xf32>
    %276 = arith.addf %273, %275 : vector<2x128xf32>
    %277 = arith.negf %276 : vector<2x128xf32>
    %278 = math.exp %277 : vector<2x128xf32>
    %cst_100 = arith.constant 1.000000e+00 : f32
    %279 = vector.broadcast %cst_100 : f32 to vector<2x128xf32>
    %280 = arith.addf %279, %278 : vector<2x128xf32>
    %281 = arith.divf %279, %280 : vector<2x128xf32>
    %282 = math.tanh %276 : vector<2x128xf32>
    %283 = vector.extract_strided_slice %281 {offsets = [0, 0], sizes = [2, 32], strides = [1, 1]} : vector<2x128xf32> to vector<2x32xf32>
    %284 = vector.extract_strided_slice %281 {offsets = [0, 32], sizes = [2, 32], strides = [1, 1]} : vector<2x128xf32> to vector<2x32xf32>
    %285 = vector.extract_strided_slice %282 {offsets = [0, 64], sizes = [2, 32], strides = [1, 1]} : vector<2x128xf32> to vector<2x32xf32>
    %286 = vector.extract_strided_slice %281 {offsets = [0, 96], sizes = [2, 32], strides = [1, 1]} : vector<2x128xf32> to vector<2x32xf32>
    %287 = arith.mulf %284, %264 : vector<2x32xf32>
    %288 = arith.mulf %283, %285 : vector<2x32xf32>
    %289 = arith.addf %287, %288 : vector<2x32xf32>
    %290 = math.tanh %289 : vector<2x32xf32>
    %291 = arith.mulf %286, %290 : vector<2x32xf32>
    %292 = arith.index_cast %c1_i32_96 : i32 to index
    %c0_101 = arith.constant 0 : index
    %c0_102 = arith.constant 0 : index
    %293 = vector.load %arg11[%292, %c0_101, %c0_102] : memref<8x2x32xf32, #tpu.memory_space<vmem>>, vector<1x2x32xf32>
    %294 = vector.shape_cast %293 : vector<1x2x32xf32> to vector<2x32xf32>
    %295 = vector.shape_cast %291 : vector<2x32xf32> to vector<1x2x32xf32>
    tpu.vector_store %arg11[%292, %c0_101, %c0_102], %295 {strides = array<i32>} : memref<8x2x32xf32, #tpu.memory_space<vmem>>, vector<1x2x32xf32>,
    %c2_i32_103 = arith.constant 2 : i32
    %296 = arith.index_cast %c2_i32_103 : i32 to index
    %c0_104 = arith.constant 0 : index
    %c0_105 = arith.constant 0 : index
    %297 = vector.load %arg10[%296, %c0_104, %c0_105] : memref<8x2x128xf32, #tpu.memory_space<vmem>>, vector<1x2x128xf32>
    %298 = vector.shape_cast %297 : vector<1x2x128xf32> to vector<2x128xf32>
    %299 = arith.truncf %291 : vector<2x32xf32> to vector<2x32xbf16>
    %cst_106 = arith.constant dense<0.000000e+00> : vector<2x128xf32>
    %300 = tpu.matmul %299, %224, %cst_106 {dimension_numbers = #tpu.dot_dimension_numbers<[1], [0], [0], [1], [0, 0, 1, 1], [], []>} : vector<2x32xbf16>, vector<32x128xbf16>, vector<2x128xf32> -> vector<2x128xf32>
    %301 = arith.addf %298, %300 : vector<2x128xf32>
    %302 = arith.negf %301 : vector<2x128xf32>
    %303 = math.exp %302 : vector<2x128xf32>
    %cst_107 = arith.constant 1.000000e+00 : f32
    %304 = vector.broadcast %cst_107 : f32 to vector<2x128xf32>
    %305 = arith.addf %304, %303 : vector<2x128xf32>
    %306 = arith.divf %304, %305 : vector<2x128xf32>
    %307 = math.tanh %301 : vector<2x128xf32>
    %308 = vector.extract_strided_slice %306 {offsets = [0, 0], sizes = [2, 32], strides = [1, 1]} : vector<2x128xf32> to vector<2x32xf32>
    %309 = vector.extract_strided_slice %306 {offsets = [0, 32], sizes = [2, 32], strides = [1, 1]} : vector<2x128xf32> to vector<2x32xf32>
    %310 = vector.extract_strided_slice %307 {offsets = [0, 64], sizes = [2, 32], strides = [1, 1]} : vector<2x128xf32> to vector<2x32xf32>
    %311 = vector.extract_strided_slice %306 {offsets = [0, 96], sizes = [2, 32], strides = [1, 1]} : vector<2x128xf32> to vector<2x32xf32>
    %312 = arith.mulf %309, %289 : vector<2x32xf32>
    %313 = arith.mulf %308, %310 : vector<2x32xf32>
    %314 = arith.addf %312, %313 : vector<2x32xf32>
    %315 = math.tanh %314 : vector<2x32xf32>
    %316 = arith.mulf %311, %315 : vector<2x32xf32>
    %317 = arith.index_cast %c2_i32_103 : i32 to index
    %c0_108 = arith.constant 0 : index
    %c0_109 = arith.constant 0 : index
    %318 = vector.load %arg11[%317, %c0_108, %c0_109] : memref<8x2x32xf32, #tpu.memory_space<vmem>>, vector<1x2x32xf32>
    %319 = vector.shape_cast %318 : vector<1x2x32xf32> to vector<2x32xf32>
    %320 = vector.shape_cast %316 : vector<2x32xf32> to vector<1x2x32xf32>
    tpu.vector_store %arg11[%317, %c0_108, %c0_109], %320 {strides = array<i32>} : memref<8x2x32xf32, #tpu.memory_space<vmem>>, vector<1x2x32xf32>,
    %c3_i32_110 = arith.constant 3 : i32
    %321 = arith.index_cast %c3_i32_110 : i32 to index
    %c0_111 = arith.constant 0 : index
    %c0_112 = arith.constant 0 : index
    %322 = vector.load %arg10[%321, %c0_111, %c0_112] : memref<8x2x128xf32, #tpu.memory_space<vmem>>, vector<1x2x128xf32>
    %323 = vector.shape_cast %322 : vector<1x2x128xf32> to vector<2x128xf32>
    %324 = arith.truncf %316 : vector<2x32xf32> to vector<2x32xbf16>
    %cst_113 = arith.constant dense<0.000000e+00> : vector<2x128xf32>
    %325 = tpu.matmul %324, %224, %cst_113 {dimension_numbers = #tpu.dot_dimension_numbers<[1], [0], [0], [1], [0, 0, 1, 1], [], []>} : vector<2x32xbf16>, vector<32x128xbf16>, vector<2x128xf32> -> vector<2x128xf32>
    %326 = arith.addf %323, %325 : vector<2x128xf32>
    %327 = arith.negf %326 : vector<2x128xf32>
    %328 = math.exp %327 : vector<2x128xf32>
    %cst_114 = arith.constant 1.000000e+00 : f32
    %329 = vector.broadcast %cst_114 : f32 to vector<2x128xf32>
    %330 = arith.addf %329, %328 : vector<2x128xf32>
    %331 = arith.divf %329, %330 : vector<2x128xf32>
    %332 = math.tanh %326 : vector<2x128xf32>
    %333 = vector.extract_strided_slice %331 {offsets = [0, 0], sizes = [2, 32], strides = [1, 1]} : vector<2x128xf32> to vector<2x32xf32>
    %334 = vector.extract_strided_slice %331 {offsets = [0, 32], sizes = [2, 32], strides = [1, 1]} : vector<2x128xf32> to vector<2x32xf32>
    %335 = vector.extract_strided_slice %332 {offsets = [0, 64], sizes = [2, 32], strides = [1, 1]} : vector<2x128xf32> to vector<2x32xf32>
    %336 = vector.extract_strided_slice %331 {offsets = [0, 96], sizes = [2, 32], strides = [1, 1]} : vector<2x128xf32> to vector<2x32xf32>
    %337 = arith.mulf %334, %314 : vector<2x32xf32>
    %338 = arith.mulf %333, %335 : vector<2x32xf32>
    %339 = arith.addf %337, %338 : vector<2x32xf32>
    %340 = math.tanh %339 : vector<2x32xf32>
    %341 = arith.mulf %336, %340 : vector<2x32xf32>
    %342 = arith.index_cast %c3_i32_110 : i32 to index
    %c0_115 = arith.constant 0 : index
    %c0_116 = arith.constant 0 : index
    %343 = vector.load %arg11[%342, %c0_115, %c0_116] : memref<8x2x32xf32, #tpu.memory_space<vmem>>, vector<1x2x32xf32>
    %344 = vector.shape_cast %343 : vector<1x2x32xf32> to vector<2x32xf32>
    %345 = vector.shape_cast %341 : vector<2x32xf32> to vector<1x2x32xf32>
    tpu.vector_store %arg11[%342, %c0_115, %c0_116], %345 {strides = array<i32>} : memref<8x2x32xf32, #tpu.memory_space<vmem>>, vector<1x2x32xf32>,
    %c4_i32_117 = arith.constant 4 : i32
    %346 = arith.index_cast %c4_i32_117 : i32 to index
    %c0_118 = arith.constant 0 : index
    %c0_119 = arith.constant 0 : index
    %347 = vector.load %arg10[%346, %c0_118, %c0_119] : memref<8x2x128xf32, #tpu.memory_space<vmem>>, vector<1x2x128xf32>
    %348 = vector.shape_cast %347 : vector<1x2x128xf32> to vector<2x128xf32>
    %349 = arith.truncf %341 : vector<2x32xf32> to vector<2x32xbf16>
    %cst_120 = arith.constant dense<0.000000e+00> : vector<2x128xf32>
    %350 = tpu.matmul %349, %224, %cst_120 {dimension_numbers = #tpu.dot_dimension_numbers<[1], [0], [0], [1], [0, 0, 1, 1], [], []>} : vector<2x32xbf16>, vector<32x128xbf16>, vector<2x128xf32> -> vector<2x128xf32>
    %351 = arith.addf %348, %350 : vector<2x128xf32>
    %352 = arith.negf %351 : vector<2x128xf32>
    %353 = math.exp %352 : vector<2x128xf32>
    %cst_121 = arith.constant 1.000000e+00 : f32
    %354 = vector.broadcast %cst_121 : f32 to vector<2x128xf32>
    %355 = arith.addf %354, %353 : vector<2x128xf32>
    %356 = arith.divf %354, %355 : vector<2x128xf32>
    %357 = math.tanh %351 : vector<2x128xf32>
    %358 = vector.extract_strided_slice %356 {offsets = [0, 0], sizes = [2, 32], strides = [1, 1]} : vector<2x128xf32> to vector<2x32xf32>
    %359 = vector.extract_strided_slice %356 {offsets = [0, 32], sizes = [2, 32], strides = [1, 1]} : vector<2x128xf32> to vector<2x32xf32>
    %360 = vector.extract_strided_slice %357 {offsets = [0, 64], sizes = [2, 32], strides = [1, 1]} : vector<2x128xf32> to vector<2x32xf32>
    %361 = vector.extract_strided_slice %356 {offsets = [0, 96], sizes = [2, 32], strides = [1, 1]} : vector<2x128xf32> to vector<2x32xf32>
    %362 = arith.mulf %359, %339 : vector<2x32xf32>
    %363 = arith.mulf %358, %360 : vector<2x32xf32>
    %364 = arith.addf %362, %363 : vector<2x32xf32>
    %365 = math.tanh %364 : vector<2x32xf32>
    %366 = arith.mulf %361, %365 : vector<2x32xf32>
    %367 = arith.index_cast %c4_i32_117 : i32 to index
    %c0_122 = arith.constant 0 : index
    %c0_123 = arith.constant 0 : index
    %368 = vector.load %arg11[%367, %c0_122, %c0_123] : memref<8x2x32xf32, #tpu.memory_space<vmem>>, vector<1x2x32xf32>
    %369 = vector.shape_cast %368 : vector<1x2x32xf32> to vector<2x32xf32>
    %370 = vector.shape_cast %366 : vector<2x32xf32> to vector<1x2x32xf32>
    tpu.vector_store %arg11[%367, %c0_122, %c0_123], %370 {strides = array<i32>} : memref<8x2x32xf32, #tpu.memory_space<vmem>>, vector<1x2x32xf32>,
    %c5_i32_124 = arith.constant 5 : i32
    %371 = arith.index_cast %c5_i32_124 : i32 to index
    %c0_125 = arith.constant 0 : index
    %c0_126 = arith.constant 0 : index
    %372 = vector.load %arg10[%371, %c0_125, %c0_126] : memref<8x2x128xf32, #tpu.memory_space<vmem>>, vector<1x2x128xf32>
    %373 = vector.shape_cast %372 : vector<1x2x128xf32> to vector<2x128xf32>
    %374 = arith.truncf %366 : vector<2x32xf32> to vector<2x32xbf16>
    %cst_127 = arith.constant dense<0.000000e+00> : vector<2x128xf32>
    %375 = tpu.matmul %374, %224, %cst_127 {dimension_numbers = #tpu.dot_dimension_numbers<[1], [0], [0], [1], [0, 0, 1, 1], [], []>} : vector<2x32xbf16>, vector<32x128xbf16>, vector<2x128xf32> -> vector<2x128xf32>
    %376 = arith.addf %373, %375 : vector<2x128xf32>
    %377 = arith.negf %376 : vector<2x128xf32>
    %378 = math.exp %377 : vector<2x128xf32>
    %cst_128 = arith.constant 1.000000e+00 : f32
    %379 = vector.broadcast %cst_128 : f32 to vector<2x128xf32>
    %380 = arith.addf %379, %378 : vector<2x128xf32>
    %381 = arith.divf %379, %380 : vector<2x128xf32>
    %382 = math.tanh %376 : vector<2x128xf32>
    %383 = vector.extract_strided_slice %381 {offsets = [0, 0], sizes = [2, 32], strides = [1, 1]} : vector<2x128xf32> to vector<2x32xf32>
    %384 = vector.extract_strided_slice %381 {offsets = [0, 32], sizes = [2, 32], strides = [1, 1]} : vector<2x128xf32> to vector<2x32xf32>
    %385 = vector.extract_strided_slice %382 {offsets = [0, 64], sizes = [2, 32], strides = [1, 1]} : vector<2x128xf32> to vector<2x32xf32>
    %386 = vector.extract_strided_slice %381 {offsets = [0, 96], sizes = [2, 32], strides = [1, 1]} : vector<2x128xf32> to vector<2x32xf32>
    %387 = arith.mulf %384, %364 : vector<2x32xf32>
    %388 = arith.mulf %383, %385 : vector<2x32xf32>
    %389 = arith.addf %387, %388 : vector<2x32xf32>
    %390 = math.tanh %389 : vector<2x32xf32>
    %391 = arith.mulf %386, %390 : vector<2x32xf32>
    %392 = arith.index_cast %c5_i32_124 : i32 to index
    %c0_129 = arith.constant 0 : index
    %c0_130 = arith.constant 0 : index
    %393 = vector.load %arg11[%392, %c0_129, %c0_130] : memref<8x2x32xf32, #tpu.memory_space<vmem>>, vector<1x2x32xf32>
    %394 = vector.shape_cast %393 : vector<1x2x32xf32> to vector<2x32xf32>
    %395 = vector.shape_cast %391 : vector<2x32xf32> to vector<1x2x32xf32>
    tpu.vector_store %arg11[%392, %c0_129, %c0_130], %395 {strides = array<i32>} : memref<8x2x32xf32, #tpu.memory_space<vmem>>, vector<1x2x32xf32>,
    %c6_i32_131 = arith.constant 6 : i32
    %396 = arith.index_cast %c6_i32_131 : i32 to index
    %c0_132 = arith.constant 0 : index
    %c0_133 = arith.constant 0 : index
    %397 = vector.load %arg10[%396, %c0_132, %c0_133] : memref<8x2x128xf32, #tpu.memory_space<vmem>>, vector<1x2x128xf32>
    %398 = vector.shape_cast %397 : vector<1x2x128xf32> to vector<2x128xf32>
    %399 = arith.truncf %391 : vector<2x32xf32> to vector<2x32xbf16>
    %cst_134 = arith.constant dense<0.000000e+00> : vector<2x128xf32>
    %400 = tpu.matmul %399, %224, %cst_134 {dimension_numbers = #tpu.dot_dimension_numbers<[1], [0], [0], [1], [0, 0, 1, 1], [], []>} : vector<2x32xbf16>, vector<32x128xbf16>, vector<2x128xf32> -> vector<2x128xf32>
    %401 = arith.addf %398, %400 : vector<2x128xf32>
    %402 = arith.negf %401 : vector<2x128xf32>
    %403 = math.exp %402 : vector<2x128xf32>
    %cst_135 = arith.constant 1.000000e+00 : f32
    %404 = vector.broadcast %cst_135 : f32 to vector<2x128xf32>
    %405 = arith.addf %404, %403 : vector<2x128xf32>
    %406 = arith.divf %404, %405 : vector<2x128xf32>
    %407 = math.tanh %401 : vector<2x128xf32>
    %408 = vector.extract_strided_slice %406 {offsets = [0, 0], sizes = [2, 32], strides = [1, 1]} : vector<2x128xf32> to vector<2x32xf32>
    %409 = vector.extract_strided_slice %406 {offsets = [0, 32], sizes = [2, 32], strides = [1, 1]} : vector<2x128xf32> to vector<2x32xf32>
    %410 = vector.extract_strided_slice %407 {offsets = [0, 64], sizes = [2, 32], strides = [1, 1]} : vector<2x128xf32> to vector<2x32xf32>
    %411 = vector.extract_strided_slice %406 {offsets = [0, 96], sizes = [2, 32], strides = [1, 1]} : vector<2x128xf32> to vector<2x32xf32>
    %412 = arith.mulf %409, %389 : vector<2x32xf32>
    %413 = arith.mulf %408, %410 : vector<2x32xf32>
    %414 = arith.addf %412, %413 : vector<2x32xf32>
    %415 = math.tanh %414 : vector<2x32xf32>
    %416 = arith.mulf %411, %415 : vector<2x32xf32>
    %417 = arith.index_cast %c6_i32_131 : i32 to index
    %c0_136 = arith.constant 0 : index
    %c0_137 = arith.constant 0 : index
    %418 = vector.load %arg11[%417, %c0_136, %c0_137] : memref<8x2x32xf32, #tpu.memory_space<vmem>>, vector<1x2x32xf32>
    %419 = vector.shape_cast %418 : vector<1x2x32xf32> to vector<2x32xf32>
    %420 = vector.shape_cast %416 : vector<2x32xf32> to vector<1x2x32xf32>
    tpu.vector_store %arg11[%417, %c0_136, %c0_137], %420 {strides = array<i32>} : memref<8x2x32xf32, #tpu.memory_space<vmem>>, vector<1x2x32xf32>,
    %c7_i32_138 = arith.constant 7 : i32
    %421 = arith.index_cast %c7_i32_138 : i32 to index
    %c0_139 = arith.constant 0 : index
    %c0_140 = arith.constant 0 : index
    %422 = vector.load %arg10[%421, %c0_139, %c0_140] : memref<8x2x128xf32, #tpu.memory_space<vmem>>, vector<1x2x128xf32>
    %423 = vector.shape_cast %422 : vector<1x2x128xf32> to vector<2x128xf32>
    %424 = arith.truncf %416 : vector<2x32xf32> to vector<2x32xbf16>
    %cst_141 = arith.constant dense<0.000000e+00> : vector<2x128xf32>
    %425 = tpu.matmul %424, %224, %cst_141 {dimension_numbers = #tpu.dot_dimension_numbers<[1], [0], [0], [1], [0, 0, 1, 1], [], []>} : vector<2x32xbf16>, vector<32x128xbf16>, vector<2x128xf32> -> vector<2x128xf32>
    %426 = arith.addf %423, %425 : vector<2x128xf32>
    %427 = arith.negf %426 : vector<2x128xf32>
    %428 = math.exp %427 : vector<2x128xf32>
    %cst_142 = arith.constant 1.000000e+00 : f32
    %429 = vector.broadcast %cst_142 : f32 to vector<2x128xf32>
    %430 = arith.addf %429, %428 : vector<2x128xf32>
    %431 = arith.divf %429, %430 : vector<2x128xf32>
    %432 = math.tanh %426 : vector<2x128xf32>
    %433 = vector.extract_strided_slice %431 {offsets = [0, 0], sizes = [2, 32], strides = [1, 1]} : vector<2x128xf32> to vector<2x32xf32>
    %434 = vector.extract_strided_slice %431 {offsets = [0, 32], sizes = [2, 32], strides = [1, 1]} : vector<2x128xf32> to vector<2x32xf32>
    %435 = vector.extract_strided_slice %432 {offsets = [0, 64], sizes = [2, 32], strides = [1, 1]} : vector<2x128xf32> to vector<2x32xf32>
    %436 = vector.extract_strided_slice %431 {offsets = [0, 96], sizes = [2, 32], strides = [1, 1]} : vector<2x128xf32> to vector<2x32xf32>
    %437 = arith.mulf %434, %414 : vector<2x32xf32>
    %438 = arith.mulf %433, %435 : vector<2x32xf32>
    %439 = arith.addf %437, %438 : vector<2x32xf32>
    %440 = math.tanh %439 : vector<2x32xf32>
    %441 = arith.mulf %436, %440 : vector<2x32xf32>
    %442 = arith.index_cast %c7_i32_138 : i32 to index
    %c0_143 = arith.constant 0 : index
    %c0_144 = arith.constant 0 : index
    %443 = vector.load %arg11[%442, %c0_143, %c0_144] : memref<8x2x32xf32, #tpu.memory_space<vmem>>, vector<1x2x32xf32>
    %444 = vector.shape_cast %443 : vector<1x2x32xf32> to vector<2x32xf32>
    %445 = vector.shape_cast %441 : vector<2x32xf32> to vector<1x2x32xf32>
    tpu.vector_store %arg11[%442, %c0_143, %c0_144], %445 {strides = array<i32>} : memref<8x2x32xf32, #tpu.memory_space<vmem>>, vector<1x2x32xf32>,
    %c8_i32_145 = arith.constant 8 : i32
    %c0_146 = arith.constant 0 : index
    %c0_147 = arith.constant 0 : index
    %446 = vector.load %arg8[%c0_146, %c0_147] : memref<32x2xbf16, #tpu.memory_space<vmem>>, vector<32x2xbf16>
    %c0_148 = arith.constant 0 : index
    %c0_149 = arith.constant 0 : index
    %c0_150 = arith.constant 0 : index
    %447 = vector.load %arg11[%c0_148, %c0_149, %c0_150] : memref<8x2x32xf32, #tpu.memory_space<vmem>>, vector<8x1x32xf32>
    %448 = vector.shape_cast %447 : vector<8x1x32xf32> to vector<8x32xf32>
    %449 = arith.truncf %448 : vector<8x32xf32> to vector<8x32xbf16>
    %cst_151 = arith.constant dense<0.000000e+00> : vector<8x2xf32>
    %450 = tpu.matmul %449, %446, %cst_151 {dimension_numbers = #tpu.dot_dimension_numbers<[1], [0], [0], [1], [0, 0, 1, 1], [], []>} : vector<8x32xbf16>, vector<32x2xbf16>, vector<8x2xf32> -> vector<8x2xf32>
    %c0_152 = arith.constant 0 : index
    %c0_153 = arith.constant 0 : index
    %c0_154 = arith.constant 0 : index
    %451 = vector.load %arg9[%c0_152, %c0_153, %c0_154] : memref<2x8x2xf32, #tpu.memory_space<vmem>>, vector<1x8x2xf32>
    %452 = vector.shape_cast %451 : vector<1x8x2xf32> to vector<8x2xf32>
    %453 = vector.shape_cast %450 : vector<8x2xf32> to vector<1x8x2xf32>
    tpu.vector_store %arg9[%c0_152, %c0_153, %c0_154], %453 {strides = array<i32>} : memref<2x8x2xf32, #tpu.memory_space<vmem>>, vector<1x8x2xf32>,
    %c0_155 = arith.constant 0 : index
    %c1_156 = arith.constant 1 : index
    %c0_157 = arith.constant 0 : index
    %454 = vector.load %arg11[%c0_155, %c1_156, %c0_157] : memref<8x2x32xf32, #tpu.memory_space<vmem>>, vector<8x1x32xf32>
    %455 = vector.shape_cast %454 : vector<8x1x32xf32> to vector<8x32xf32>
    %456 = arith.truncf %455 : vector<8x32xf32> to vector<8x32xbf16>
    %cst_158 = arith.constant dense<0.000000e+00> : vector<8x2xf32>
    %457 = tpu.matmul %456, %446, %cst_158 {dimension_numbers = #tpu.dot_dimension_numbers<[1], [0], [0], [1], [0, 0, 1, 1], [], []>} : vector<8x32xbf16>, vector<32x2xbf16>, vector<8x2xf32> -> vector<8x2xf32>
    %c1_159 = arith.constant 1 : index
    %c0_160 = arith.constant 0 : index
    %c0_161 = arith.constant 0 : index
    %458 = vector.load %arg9[%c1_159, %c0_160, %c0_161] : memref<2x8x2xf32, #tpu.memory_space<vmem>>, vector<1x8x2xf32>
    %459 = vector.shape_cast %458 : vector<1x8x2xf32> to vector<8x2xf32>
    %460 = vector.shape_cast %457 : vector<8x2xf32> to vector<1x8x2xf32>
    tpu.vector_store %arg9[%c1_159, %c0_160, %c0_161], %460 {strides = array<i32>} : memref<2x8x2xf32, #tpu.memory_space<vmem>>, vector<1x8x2xf32>,
    return
  }
  func.func @transform_0(%arg0: i32) -> (i32, i32, i32) {
    %c0_i32 = arith.constant 0 : i32
    %c0_i32_0 = arith.constant 0 : i32
    %c0_i32_1 = arith.constant 0 : i32
    %c0_i32_2 = arith.constant 0 : i32
    return %c0_i32, %c0_i32_0, %c0_i32_1 : i32, i32, i32
  }
  func.func @transform_1(%arg0: i32) -> (i32, i32) {
    %c0_i32 = arith.constant 0 : i32
    %c0_i32_0 = arith.constant 0 : i32
    %c0_i32_1 = arith.constant 0 : i32
    return %c0_i32, %c0_i32_0 : i32, i32
  }
  func.func @transform_2(%arg0: i32) -> (i32, i32) {
    %c0_i32 = arith.constant 0 : i32
    %c0_i32_0 = arith.constant 0 : i32
    %c0_i32_1 = arith.constant 0 : i32
    return %c0_i32, %c0_i32_0 : i32, i32
  }
  func.func @transform_3(%arg0: i32) -> (i32, i32) {
    %c0_i32 = arith.constant 0 : i32
    %c0_i32_0 = arith.constant 0 : i32
    %c0_i32_1 = arith.constant 0 : i32
    return %c0_i32, %c0_i32_0 : i32, i32
  }
  func.func @transform_4(%arg0: i32) -> (i32, i32) {
    %c0_i32 = arith.constant 0 : i32
    %c0_i32_0 = arith.constant 0 : i32
    %c0_i32_1 = arith.constant 0 : i32
    return %c0_i32, %c0_i32_0 : i32, i32
  }
  func.func @transform_5(%arg0: i32) -> (i32, i32) {
    %c0_i32 = arith.constant 0 : i32
    %c0_i32_0 = arith.constant 0 : i32
    %c0_i32_1 = arith.constant 0 : i32
    return %c0_i32, %c0_i32_0 : i32, i32
  }
  func.func @transform_6(%arg0: i32) -> (i32, i32) {
    %c0_i32 = arith.constant 0 : i32
    %c0_i32_0 = arith.constant 0 : i32
    %c0_i32_1 = arith.constant 0 : i32
    return %c0_i32, %c0_i32_0 : i32, i32
  }
  func.func @transform_7(%arg0: i32) -> (i32, i32) {
    %c0_i32 = arith.constant 0 : i32
    %c0_i32_0 = arith.constant 0 : i32
    %c0_i32_1 = arith.constant 0 : i32
    return %c0_i32, %c0_i32_0 : i32, i32
  }
  func.func @transform_8(%arg0: i32) -> (i32, i32, i32) {
    %c0_i32 = arith.constant 0 : i32
    %c0_i32_0 = arith.constant 0 : i32
    %c0_i32_1 = arith.constant 0 : i32
    %c0_i32_2 = arith.constant 0 : i32
    return %c0_i32, %c0_i32_0, %c0_i32_1 : i32, i32, i32
  }
}

</mosaic_0001>

<llo_original>
// kernel: np_lstm_small_forward.1
$region0: #{np_lstm_small_forward.1}
  #allocation0 [shape = 'u32[]', space=smem, size = 0x4, offset = 0x4, fixed_abs, tag = 'smem constant byte address 0x4 - core index']
  #allocation1 [shape = 'u32[144,128]{1,0:T(1,128)}', space=vmem, size = 0x12000, scoped, tag = 'internal scratch']
  #allocation2 [shape = 'f32[8,2,128]{2,1,0:T(2,128)}', space=vmem, size = 0x2000, scoped, tag = 'scratch operand']
  #allocation3 [shape = 'f32[8,2,32]{2,1,0:T(2,128)}', space=vmem, size = 0x2000, scoped, tag = 'scratch operand']
  %s0 = inlined_call_operand.vmem [shape: f32[2,8,8], index: 0, kind: input, shape index: {}]
  %s1 = inlined_call_operand.vmem [shape: bf16[8,128], index: 1, kind: input, shape index: {}]
  %s2 = inlined_call_operand.hbm [shape: bf16[32,128], index: 2, kind: input, shape index: {}]
  %s3 = inlined_call_operand.hbm [shape: f32[1,128], index: 3, kind: input, shape index: {}]
  %s4 = inlined_call_operand.hbm [shape: bf16[32,128], index: 4, kind: input, shape index: {}]
  %s5 = inlined_call_operand.hbm [shape: bf16[32,128], index: 5, kind: input, shape index: {}]
  %s6 = inlined_call_operand.vmem [shape: f32[1,128], index: 6, kind: input, shape index: {}]
  %s7 = inlined_call_operand.vmem [shape: bf16[32,2], index: 7, kind: input, shape index: {}]
  %s8 = inlined_call_operand.vmem [shape: f32[2,8,2], index: 8, kind: output, shape index: {}]
  %s9 = sld [smem:[#allocation0]]
  $region58: #{np_lstm_small_forward.1} parent=0
    _
  %s11 = ssub.s32 1, %s9
  %s12 = scalar_select 0, %s11, %s9
  $region1: #{np_lstm_small_forward.1} parent=0
    #allocation4 [shape = 'u8[8192]{0}', space=vmem, size = 0x2000, scoped, tag = 'input window, operand 2, single buffered']
    #allocation5 [shape = 's32[1]{0}', space=sflag, size = 0x4, scoped, tag = 'scoped memory for np_lstm_small_forward.1']
    #allocation6 [shape = 'u8[512]{0}', space=vmem, size = 0x400, scoped, tag = 'input window, operand 3, single buffered']
    #allocation7 [shape = 's32[1]{0}', space=sflag, size = 0x4, scoped, tag = 'scoped memory for np_lstm_small_forward.1']
    #allocation8 [shape = 'u8[8192]{0}', space=vmem, size = 0x2000, scoped, tag = 'input window, operand 4, single buffered']
    #allocation9 [shape = 'u8[8192]{0}', space=vmem, size = 0x2000, scoped, tag = 'input window, operand 5, single buffered']
    #allocation10 [shape = 's32[1]{0}', space=sflag, size = 0x4, scoped, tag = 'scoped memory for np_lstm_small_forward.1']
    %13 = vsyncpa [#allocation5], 0
    %14 = vsyncpa [#allocation7], 0
    %15 = vsyncpa [#allocation10], 0
    // Predicated region
    $region2: #{np_lstm_small_forward.1} parent=1 // pred_check
      _
    $region3: #{np_lstm_small_forward.1} parent=1 // pred_check_branch
      %17 = sbr.rel (0) target = $region5
    $region4: #{np_lstm_small_forward.1} parent=1 // pred_region
      _
    $region5: #{np_lstm_small_forward.1} parent=1 // pred_fallthru
      _
    // Predicated region
    $region6: #{np_lstm_small_forward.1} parent=1 // pred_check
      _
    $region7: #{np_lstm_small_forward.1} parent=1 // pred_check_branch
      %19 = sbr.rel (0) target = $region9
    $region8: #{np_lstm_small_forward.1} parent=1 // pred_region
      _
    $region9: #{np_lstm_small_forward.1} parent=1 // pred_fallthru
      _
    // Predicated region
    $region10: #{np_lstm_small_forward.1} parent=1 // pred_check
      _
    $region11: #{np_lstm_small_forward.1} parent=1 // pred_check_branch
      %21 = sbr.rel (0) target = $region13
    $region12: #{np_lstm_small_forward.1} parent=1 // pred_region
      %s23 = ssub.s32 256, 256
      %24 = vsyncadd [#allocation5], %s23
      %s25 = sshll.u32 [#allocation4], 4
      %s26 = int_to_ptr.vmem [resolvable:$true] %s25
      %31 = dma.hbm_to_vmem [thread:$0]  %s2, 256, %s26, [#allocation5], 64, 64, 4
    $region13: #{np_lstm_small_forward.1} parent=1 // pred_fallthru
      _
    // Predicated region
    $region14: #{np_lstm_small_forward.1} parent=1 // pred_check
      _
    $region15: #{np_lstm_small_forward.1} parent=1 // pred_check_branch
      %33 = sbr.rel (0) target = $region17
    $region16: #{np_lstm_small_forward.1} parent=1 // pred_region
      %s35 = ssub.s32 16, 16
      %36 = vsyncadd [#allocation7], %s35
      %s38 = sshll.u32 [#allocation6], 4
      %s39 = int_to_ptr.vmem [resolvable:$true] %s38
      %41 = dma.hbm_to_vmem [thread:$0]  %s3, 16, %s39, [#allocation7]
    $region17: #{np_lstm_small_forward.1} parent=1 // pred_fallthru
      _
    // Predicated region
    $region18: #{np_lstm_small_forward.1} parent=1 // pred_check
      _
    $region19: #{np_lstm_small_forward.1} parent=1 // pred_check_branch
      %43 = sbr.rel (0) target = $region21
    $region20: #{np_lstm_small_forward.1} parent=1 // pred_region
      %s45 = ssub.s32 256, 256
      %46 = vsyncadd [#allocation7], %s45
      %s47 = sshll.u32 [#allocation8], 4
      %s48 = int_to_ptr.vmem [resolvable:$true] %s47
      %53 = dma.hbm_to_vmem [thread:$0]  %s4, 256, %s48, [#allocation7], 64, 64, 4
    $region21: #{np_lstm_small_forward.1} parent=1 // pred_fallthru
      _
    // Predicated region
    $region22: #{np_lstm_small_forward.1} parent=1 // pred_check
      _
    $region23: #{np_lstm_small_forward.1} parent=1 // pred_check_branch
      %55 = sbr.rel (0) target = $region25
    $region24: #{np_lstm_small_forward.1} parent=1 // pred_region
      %s57 = ssub.s32 256, 256
      %58 = vsyncadd [#allocation10], %s57
      %s59 = sshll.u32 [#allocation9], 4
      %s60 = int_to_ptr.vmem [resolvable:$true] %s59
      %65 = dma.hbm_to_vmem [thread:$0]  %s5, 256, %s60, [#allocation10], 64, 64, 4
    $region25: #{np_lstm_small_forward.1} parent=1 // pred_fallthru
      _
    // Predicated region
    $region26: #{np_lstm_small_forward.1} parent=1 // pred_check
      _
    $region27: #{np_lstm_small_forward.1} parent=1 // pred_check_branch
      %67 = sbr.rel (0) target = $region29
    $region28: #{np_lstm_small_forward.1} parent=1 // pred_region
      _
    $region29: #{np_lstm_small_forward.1} parent=1 // pred_fallthru
      _
    // Predicated region
    $region30: #{np_lstm_small_forward.1} parent=1 // pred_check
      _
    $region31: #{np_lstm_small_forward.1} parent=1 // pred_check_branch
      %69 = sbr.rel (0) target = $region33
    $region32: #{np_lstm_small_forward.1} parent=1 // pred_region
      _
    $region33: #{np_lstm_small_forward.1} parent=1 // pred_fallthru
      _
    // Predicated region
    $region34: #{np_lstm_small_forward.1} parent=1 // pred_check
      _
    $region35: #{np_lstm_small_forward.1} parent=1 // pred_check_branch
      %71 = sbr.rel (0) target = $region37
    $region36: #{np_lstm_small_forward.1} parent=1 // pred_region
      %72 = dma.done [#allocation5], 256
    $region37: #{np_lstm_small_forward.1} parent=1 // pred_fallthru
      _
    // Predicated region
    $region38: #{np_lstm_small_forward.1} parent=1 // pred_check
      _
    $region39: #{np_lstm_small_forward.1} parent=1 // pred_check_branch
      %74 = sbr.rel (0) target = $region41
    $region40: #{np_lstm_small_forward.1} parent=1 // pred_region
      %75 = dma.done [#allocation7], 16
    $region41: #{np_lstm_small_forward.1} parent=1 // pred_fallthru
      _
    // Predicated region
    $region42: #{np_lstm_small_forward.1} parent=1 // pred_check
      _
    $region43: #{np_lstm_small_forward.1} parent=1 // pred_check_branch
      %77 = sbr.rel (0) target = $region45
    $region44: #{np_lstm_small_forward.1} parent=1 // pred_region
      %78 = dma.done [#allocation7], 256
    $region45: #{np_lstm_small_forward.1} parent=1 // pred_fallthru
      _
    // Predicated region
    $region46: #{np_lstm_small_forward.1} parent=1 // pred_check
      _
    $region47: #{np_lstm_small_forward.1} parent=1 // pred_check_branch
      %80 = sbr.rel (0) target = $region49
    $region48: #{np_lstm_small_forward.1} parent=1 // pred_region
      %81 = dma.done [#allocation10], 256
    $region49: #{np_lstm_small_forward.1} parent=1 // pred_fallthru
      _
    %v83 = vld [vmem:[%s1] sm:$0xf]
    %v84 = vld [vmem:[#allocation4] sm:$0xf]
    %v85 = vld [vmem:[#allocation4 + $0x4] sm:$0xf]
    %v86 = vld [vmem:[#allocation4 + $0x8] sm:$0xf]
    %v87 = vld [vmem:[#allocation4 + $0xc] sm:$0xf]
    %v88 = vld [vmem:[#allocation6] sm:$0x1]
    %v89 = vld [vmem:[%s0] sm:$0xff]
    %v90 = vpack.c.bf16 %v89, %v89
    %v92 = vlaneseq
    %v93 = vshrl.u32 %v92, 7
    %v94 = vsub.s32 0, %v93
    %v95 = vrot.slane %v88, %v94
    %vm97 = vcmask 64512
    %v99 = vsel %vm97, %v90, 0
    %vm101 = vcmask 1043456
    %v103 = vsel %vm101, %v83, 0
    %105 = vmatprep.subr.bf16.mxu0 0
    %106 = vmatpush1.bf16.msra.mxu0 0
    %107 = vmatprep.subr.bf16.mxu0 0
    %108 = vmatpush1.bf16.msra.mxu0 0
    %109 = vmatprep.subr.bf16.mxu0 0
    %110 = vmatpush1.bf16.msra.mxu0 0
    %111 = vmatprep.subr.bf16.mxu0 0
    %112 = vmatpush1.bf16.msra.mxu0 0
    %113 = vmatprep.subr.bf16.mxu0 0
    %114 = vmatpush1.bf16.msra.mxu0 0
    %115 = vmatprep.subr.bf16.mxu0 0
    %116 = vmatpush1.bf16.msra.mxu0 0
    %117 = vmatprep.subr.bf16.mxu0 0
    %118 = vmatpush1.bf16.msra.mxu0 0
    %119 = vmatprep.subr.bf16.mxu0 0
    %120 = vmatpush1.bf16.msra.mxu0 %v103
    %121 = vmatprep.subr.bf16.mxu0 0
    %122 = vmatpush2.bf16.msra.mxu0 0
    %123 = vmatprep.subr.bf16.mxu0 0
    %124 = vmatpush2.bf16.msra.mxu0 0
    %125 = vmatprep.subr.bf16.mxu0 0
    %126 = vmatpush2.bf16.msra.mxu0 0
    %127 = vmatprep.subr.bf16.mxu0 0
    %128 = vmatpush2.bf16.msra.mxu0 0
    %129 = vmatprep.subr.bf16.mxu0 0
    %130 = vmatpush2.bf16.msra.mxu0 0
    %131 = vmatprep.subr.bf16.mxu0 0
    %132 = vmatpush2.bf16.msra.mxu0 0
    %133 = vmatprep.subr.bf16.mxu0 0
    %134 = vmatpush2.bf16.msra.mxu0 0
    %135 = vmatprep.subr.bf16.mxu0 0
    %136 = vmatpush2.bf16.msra.mxu0 0
    %137 = vmatprep.mubr.bf16.mxu0 0
    %138 = vmatmul.mubr.bf16.gmra.mxu0 %v99
    %v139 = vpop.f32.mrf.mxu0
    %v140 = vadd.f32 %v95, %v139
    %v141 = vpop.f32.mrf.mxu0
    %v142 = vpop.f32.mrf.mxu0
    %v143 = vpop.f32.mrf.mxu0
    %144 = vdwg.mxu0
    %v146 = vcombine.high %v140, %v140
    %v148 = vunpack.c.l.s4 1966171168
    %v149 = vunpack.c.0.s8 %v148
    %v150 = vlaneseq
    %v151 = vshrl.u32 %v150, 7
    %v152 = vsub.s32 %v149, %v151
    %v153 = vrot.slane %v140, %v152
    %v155 = vunpack.c.l.s4 1966171168
    %v156 = vunpack.c.0.s8 %v155
    %v157 = vlaneseq
    %v158 = vshrl.u32 %v157, 7
    %v159 = vsub.s32 %v156, %v158
    %v160 = vrot.slane %v146, %v159
    %v161 = vcombine.high %v153, %v153
    %v162 = vcombine.high %v160, %v160
    %v164 = vunpack.c.l.s4 1966171168
    %v165 = vunpack.c.0.s8 %v164
    %v166 = vlaneseq
    %v167 = vshrl.u32 %v166, 7
    %v168 = vsub.s32 %v165, %v167
    %v169 = vrot.slane %v153, %v168
    %v171 = vunpack.c.l.s4 1966171168
    %v172 = vunpack.c.0.s8 %v171
    %v173 = vlaneseq
    %v174 = vshrl.u32 %v173, 7
    %v175 = vsub.s32 %v172, %v174
    %v176 = vrot.slane %v160, %v175
    %v178 = vunpack.c.l.s4 1966171168
    %v179 = vunpack.c.0.s8 %v178
    %v180 = vlaneseq
    %v181 = vshrl.u32 %v180, 7
    %v182 = vsub.s32 %v179, %v181
    %v183 = vrot.slane %v161, %v182
    %v185 = vunpack.c.l.s4 1966171168
    %v186 = vunpack.c.0.s8 %v185
    %v187 = vlaneseq
    %v188 = vshrl.u32 %v187, 7
    %v189 = vsub.s32 %v186, %v188
    %v190 = vrot.slane %v162, %v189
    %v191 = vcombine.high %v169, %v169
    %v192 = vcombine.high %v176, %v176
    %v193 = vcombine.high %v183, %v183
    %v194 = vcombine.high %v190, %v190
    %203 = vst [vmem:[#allocation2] sm:$0x1] %v169
    %204 = vst [vmem:[#allocation2 + $0x2] sm:$0x1] %v183
    %205 = vst [vmem:[#allocation2 + $0x4] sm:$0x1] %v191
    %206 = vst [vmem:[#allocation2 + $0x6] sm:$0x1] %v193
    %207 = vst [vmem:[#allocation2 + $0x8] sm:$0x1] %v176
    %208 = vst [vmem:[#allocation2 + $0xa] sm:$0x1] %v190
    %209 = vst [vmem:[#allocation2 + $0xc] sm:$0x1] %v192
    %210 = vst [vmem:[#allocation2 + $0xe] sm:$0x1] %v194
    %s211 = scalar_lea.vmem %s0, 8
    %v212 = vld [vmem:[%s211] sm:$0xff]
    %v213 = vpack.c.bf16 %v212, %v212
    %v215 = vsel %vm97, %v213, 0
    %217 = vmatprep.subr.bf16.mxu0 0
    %218 = vmatpush1.bf16.msra.mxu0 0
    %219 = vmatprep.subr.bf16.mxu0 0
    %220 = vmatpush1.bf16.msra.mxu0 0
    %221 = vmatprep.subr.bf16.mxu0 0
    %222 = vmatpush1.bf16.msra.mxu0 0
    %223 = vmatprep.subr.bf16.mxu0 0
    %224 = vmatpush1.bf16.msra.mxu0 0
    %225 = vmatprep.subr.bf16.mxu0 0
    %226 = vmatpush1.bf16.msra.mxu0 0
    %227 = vmatprep.subr.bf16.mxu0 0
    %228 = vmatpush1.bf16.msra.mxu0 0
    %229 = vmatprep.subr.bf16.mxu0 0
    %230 = vmatpush1.bf16.msra.mxu0 0
    %231 = vmatprep.subr.bf16.mxu0 0
    %232 = vmatpush1.bf16.msra.mxu0 %v103
    %233 = vmatprep.subr.bf16.mxu0 0
    %234 = vmatpush2.bf16.msra.mxu0 0
    %235 = vmatprep.subr.bf16.mxu0 0
    %236 = vmatpush2.bf16.msra.mxu0 0
    %237 = vmatprep.subr.bf16.mxu0 0
    %238 = vmatpush2.bf16.msra.mxu0 0
    %239 = vmatprep.subr.bf16.mxu0 0
    %240 = vmatpush2.bf16.msra.mxu0 0
    %241 = vmatprep.subr.bf16.mxu0 0
    %242 = vmatpush2.bf16.msra.mxu0 0
    %243 = vmatprep.subr.bf16.mxu0 0
    %244 = vmatpush2.bf16.msra.mxu0 0
    %245 = vmatprep.subr.bf16.mxu0 0
    %246 = vmatpush2.bf16.msra.mxu0 0
    %247 = vmatprep.subr.bf16.mxu0 0
    %248 = vmatpush2.bf16.msra.mxu0 0
    %249 = vmatprep.mubr.bf16.mxu0 0
    %250 = vmatmul.mubr.bf16.gmra.mxu0 %v215
    %v251 = vpop.f32.mrf.mxu0
    %v252 = vadd.f32 %v95, %v251
    %v253 = vpop.f32.mrf.mxu0
    %v254 = vpop.f32.mrf.mxu0
    %v255 = vpop.f32.mrf.mxu0
    %256 = vdwg.mxu0
    %v258 = vcombine.high %v252, %v252
    %v260 = vunpack.c.l.s4 1966171168
    %v261 = vunpack.c.0.s8 %v260
    %v262 = vlaneseq
    %v263 = vshrl.u32 %v262, 7
    %v264 = vsub.s32 %v261, %v263
    %v265 = vrot.slane %v252, %v264
    %v267 = vunpack.c.l.s4 1966171168
    %v268 = vunpack.c.0.s8 %v267
    %v269 = vlaneseq
    %v270 = vshrl.u32 %v269, 7
    %v271 = vsub.s32 %v268, %v270
    %v272 = vrot.slane %v258, %v271
    %v273 = vcombine.high %v265, %v265
    %v274 = vcombine.high %v272, %v272
    %v276 = vunpack.c.l.s4 1966171168
    %v277 = vunpack.c.0.s8 %v276
    %v278 = vlaneseq
    %v279 = vshrl.u32 %v278, 7
    %v280 = vsub.s32 %v277, %v279
    %v281 = vrot.slane %v265, %v280
    %v283 = vunpack.c.l.s4 1966171168
    %v284 = vunpack.c.0.s8 %v283
    %v285 = vlaneseq
    %v286 = vshrl.u32 %v285, 7
    %v287 = vsub.s32 %v284, %v286
    %v288 = vrot.slane %v272, %v287
    %v290 = vunpack.c.l.s4 1966171168
    %v291 = vunpack.c.0.s8 %v290
    %v292 = vlaneseq
    %v293 = vshrl.u32 %v292, 7
    %v294 = vsub.s32 %v291, %v293
    %v295 = vrot.slane %v273, %v294
    %v297 = vunpack.c.l.s4 1966171168
    %v298 = vunpack.c.0.s8 %v297
    %v299 = vlaneseq
    %v300 = vshrl.u32 %v299, 7
    %v301 = vsub.s32 %v298, %v300
    %v302 = vrot.slane %v274, %v301
    %v303 = vcombine.high %v281, %v281
    %v304 = vcombine.high %v288, %v288
    %v305 = vcombine.high %v295, %v295
    %v306 = vcombine.high %v302, %v302
    %315 = vst [vmem:[#allocation2 + $0x1] sm:$0x1] %v281
    %316 = vst [vmem:[#allocation2 + $0x3] sm:$0x1] %v295
    %317 = vst [vmem:[#allocation2 + $0x5] sm:$0x1] %v303
    %318 = vst [vmem:[#allocation2 + $0x7] sm:$0x1] %v305
    %319 = vst [vmem:[#allocation2 + $0x9] sm:$0x1] %v288
    %320 = vst [vmem:[#allocation2 + $0xb] sm:$0x1] %v302
    %321 = vst [vmem:[#allocation2 + $0xd] sm:$0x1] %v304
    %322 = vst [vmem:[#allocation2 + $0xf] sm:$0x1] %v306
    %v323 = vld [vmem:[#allocation2] sm:$0x3]
    %v328 = vunpack.c.l.b16 %v84
    %v329 = vunpack.c.l.b16 %v85
    %v330 = vunpack.c.l.b16 %v86
    %v331 = vunpack.c.l.b16 %v87
    %v332 = vpack.c.b16 %v329, %v328
    %v333 = vpack.c.b16 %v331, %v330
    %vm336 = vcmask 261120
    %v338 = vsel %vm336, 0, 0
    %340 = vmatprep.subr.bf16.mxu0 0
    %341 = vmatpush1.bf16.msra.mxu0 0
    %342 = vmatprep.subr.bf16.mxu0 0
    %343 = vmatpush1.bf16.msra.mxu0 0
    %344 = vmatprep.subr.bf16.mxu0 0
    %345 = vmatpush1.bf16.msra.mxu0 0
    %346 = vmatprep.subr.bf16.mxu0 0
    %347 = vmatpush1.bf16.msra.mxu0 0
    %348 = vmatprep.subr.bf16.mxu0 0
    %349 = vmatpush1.bf16.msra.mxu0 0
    %350 = vmatprep.subr.bf16.mxu0 0
    %351 = vmatpush1.bf16.msra.mxu0 0
    %352 = vmatprep.subr.bf16.mxu0 0
    %353 = vmatpush1.bf16.msra.mxu0 %v333
    %354 = vmatprep.subr.bf16.mxu0 0
    %355 = vmatpush1.bf16.msra.mxu0 %v332
    %356 = vmatprep.subr.bf16.mxu0 0
    %357 = vmatpush2.bf16.msra.mxu0 0
    %358 = vmatprep.subr.bf16.mxu0 0
    %359 = vmatpush2.bf16.msra.mxu0 0
    %360 = vmatprep.subr.bf16.mxu0 0
    %361 = vmatpush2.bf16.msra.mxu0 0
    %362 = vmatprep.subr.bf16.mxu0 0
    %363 = vmatpush2.bf16.msra.mxu0 0
    %364 = vmatprep.subr.bf16.mxu0 0
    %365 = vmatpush2.bf16.msra.mxu0 0
    %366 = vmatprep.subr.bf16.mxu0 0
    %367 = vmatpush2.bf16.msra.mxu0 0
    %368 = vmatprep.subr.bf16.mxu0 0
    %369 = vmatpush2.bf16.msra.mxu0 0
    %370 = vmatprep.subr.bf16.mxu0 0
    %371 = vmatpush2.bf16.msra.mxu0 0
    %372 = vmatprep.mubr.bf16.mxu0 0
    %373 = vmatmul.mubr.bf16.gmra.mxu0 %v338
    %v374 = vpop.f32.mrf.mxu0
    %v375 = vadd.f32 0.0, %v374
    %v376 = vpop.f32.mrf.mxu0
    %v377 = vpop.f32.mrf.mxu0
    %v378 = vpop.f32.mrf.mxu0
    %379 = vdwg.mxu0
    %v380 = vadd.f32 %v323, %v375
    %v381 = vxor.u32 %v380, 2147483648
    %v382 = vmul.f32 %v381, 1.442695
    %v383 = vpow.pop %v382
    %v384 = vadd.f32 %v383, 1.0
    %v385 = vrcp.pop %v384
    %v386 = vmul.f32 1.0, %v385
    %v387 = vtanh.pop %v380
    %v388 = vmul.f32 %v386, 0.0
    %390 = vrot.lane.b32.xlu0 %v387, 64
    %v391 = vpop.permute.xlu0 %390
    %v393 = vmul.f32 %v386, %v391
    %395 = vrot.lane.b32.xlu0 %v393, 32
    %v396 = vpop.permute.xlu0 %395
    %v398 = vadd.f32 %v388, %v396
    %v399 = vtanh.pop %v398
    %401 = vrot.lane.b32.xlu0 %v399, 64
    %v402 = vpop.permute.xlu0 %401
    %v404 = vmul.f32 %v386, %v402
    %406 = vrot.lane.b32.xlu0 %v404, 32
    %v407 = vpop.permute.xlu0 %406
    %vm409 = vcmask 254976
    %410 = vst.msk [vmem:[#allocation3] sm:$0x3] %vm409, %v407
    %s411 = scalar_lea.vmem [#allocation2], 2
    %v412 = vld [vmem:[%s411] sm:$0x3]
    %v413 = vpack.c.bf16 %v404, %v404
    %415 = vrot.lane.b32.xlu0 %v413, 32
    %v416 = vpop.permute.xlu0 %415
    %v418 = vsel %vm336, %v416, 0
    %420 = vmatprep.subr.bf16.mxu0 0
    %421 = vmatpush1.bf16.msra.mxu0 0
    %422 = vmatprep.subr.bf16.mxu0 0
    %423 = vmatpush1.bf16.msra.mxu0 0
    %424 = vmatprep.subr.bf16.mxu0 0
    %425 = vmatpush1.bf16.msra.mxu0 0
    %426 = vmatprep.subr.bf16.mxu0 0
    %427 = vmatpush1.bf16.msra.mxu0 0
    %428 = vmatprep.subr.bf16.mxu0 0
    %429 = vmatpush1.bf16.msra.mxu0 0
    %430 = vmatprep.subr.bf16.mxu0 0
    %431 = vmatpush1.bf16.msra.mxu0 0
    %432 = vmatprep.subr.bf16.mxu0 0
    %433 = vmatpush1.bf16.msra.mxu0 %v333
    %434 = vmatprep.subr.bf16.mxu0 0
    %435 = vmatpush1.bf16.msra.mxu0 %v332
    %436 = vmatprep.subr.bf16.mxu0 0
    %437 = vmatpush2.bf16.msra.mxu0 0
    %438 = vmatprep.subr.bf16.mxu0 0
    %439 = vmatpush2.bf16.msra.mxu0 0
    %440 = vmatprep.subr.bf16.mxu0 0
    %441 = vmatpush2.bf16.msra.mxu0 0
    %442 = vmatprep.subr.bf16.mxu0 0
    %443 = vmatpush2.bf16.msra.mxu0 0
    %444 = vmatprep.subr.bf16.mxu0 0
    %445 = vmatpush2.bf16.msra.mxu0 0
    %446 = vmatprep.subr.bf16.mxu0 0
    %447 = vmatpush2.bf16.msra.mxu0 0
    %448 = vmatprep.subr.bf16.mxu0 0
    %449 = vmatpush2.bf16.msra.mxu0 0
    %450 = vmatprep.subr.bf16.mxu0 0
    %451 = vmatpush2.bf16.msra.mxu0 0
    %452 = vmatprep.mubr.bf16.mxu0 0
    %453 = vmatmul.mubr.bf16.gmra.mxu0 %v418
    %v454 = vpop.f32.mrf.mxu0
    %v455 = vadd.f32 0.0, %v454
    %v456 = vpop.f32.mrf.mxu0
    %v457 = vpop.f32.mrf.mxu0
    %v458 = vpop.f32.mrf.mxu0
    %459 = vdwg.mxu0
    %v460 = vadd.f32 %v412, %v455
    %v461 = vxor.u32 %v460, 2147483648
    %v462 = vmul.f32 %v461, 1.442695
    %v463 = vpow.pop %v462
    %v464 = vadd.f32 %v463, 1.0
    %v465 = vrcp.pop %v464
    %v466 = vmul.f32 1.0, %v465
    %v467 = vtanh.pop %v460
    %v468 = vmul.f32 %v466, %v398
    %470 = vrot.lane.b32.xlu0 %v467, 64
    %v471 = vpop.permute.xlu0 %470
    %v473 = vmul.f32 %v466, %v471
    %475 = vrot.lane.b32.xlu0 %v473, 32
    %v476 = vpop.permute.xlu0 %475
    %v478 = vadd.f32 %v468, %v476
    %v479 = vtanh.pop %v478
    %481 = vrot.lane.b32.xlu0 %v479, 64
    %v482 = vpop.permute.xlu0 %481
    %v484 = vmul.f32 %v466, %v482
    %486 = vrot.lane.b32.xlu0 %v484, 32
    %v487 = vpop.permute.xlu0 %486
    %s489 = scalar_lea.vmem [#allocation3], 2
    %490 = vst.msk [vmem:[%s489] sm:$0x3] %vm409, %v487
    %s491 = scalar_lea.vmem [#allocation2], 4
    %v492 = vld [vmem:[%s491] sm:$0x3]
    %v493 = vpack.c.bf16 %v484, %v484
    %495 = vrot.lane.b32.xlu0 %v493, 32
    %v496 = vpop.permute.xlu0 %495
    %v498 = vsel %vm336, %v496, 0
    %500 = vmatprep.subr.bf16.mxu0 0
    %501 = vmatpush1.bf16.msra.mxu0 0
    %502 = vmatprep.subr.bf16.mxu0 0
    %503 = vmatpush1.bf16.msra.mxu0 0
    %504 = vmatprep.subr.bf16.mxu0 0
    %505 = vmatpush1.bf16.msra.mxu0 0
    %506 = vmatprep.subr.bf16.mxu0 0
    %507 = vmatpush1.bf16.msra.mxu0 0
    %508 = vmatprep.subr.bf16.mxu0 0
    %509 = vmatpush1.bf16.msra.mxu0 0
    %510 = vmatprep.subr.bf16.mxu0 0
    %511 = vmatpush1.bf16.msra.mxu0 0
    %512 = vmatprep.subr.bf16.mxu0 0
    %513 = vmatpush1.bf16.msra.mxu0 %v333
    %514 = vmatprep.subr.bf16.mxu0 0
    %515 = vmatpush1.bf16.msra.mxu0 %v332
    %516 = vmatprep.subr.bf16.mxu0 0
    %517 = vmatpush2.bf16.msra.mxu0 0
    %518 = vmatprep.subr.bf16.mxu0 0
    %519 = vmatpush2.bf16.msra.mxu0 0
    %520 = vmatprep.subr.bf16.mxu0 0
    %521 = vmatpush2.bf16.msra.mxu0 0
    %522 = vmatprep.subr.bf16.mxu0 0
    %523 = vmatpush2.bf16.msra.mxu0 0
    %524 = vmatprep.subr.bf16.mxu0 0
    %525 = vmatpush2.bf16.msra.mxu0 0
    %526 = vmatprep.subr.bf16.mxu0 0
    %527 = vmatpush2.bf16.msra.mxu0 0
    %528 = vmatprep.subr.bf16.mxu0 0
    %529 = vmatpush2.bf16.msra.mxu0 0
    %530 = vmatprep.subr.bf16.mxu0 0
    %531 = vmatpush2.bf16.msra.mxu0 0
    %532 = vmatprep.mubr.bf16.mxu0 0
    %533 = vmatmul.mubr.bf16.gmra.mxu0 %v498
    %v534 = vpop.f32.mrf.mxu0
    %v535 = vadd.f32 0.0, %v534
    %v536 = vpop.f32.mrf.mxu0
    %v537 = vpop.f32.mrf.mxu0
    %v538 = vpop.f32.mrf.mxu0
    %539 = vdwg.mxu0
    %v540 = vadd.f32 %v492, %v535
    %v541 = vxor.u32 %v540, 2147483648
    %v542 = vmul.f32 %v541, 1.442695
    %v543 = vpow.pop %v542
    %v544 = vadd.f32 %v543, 1.0
    %v545 = vrcp.pop %v544
    %v546 = vmul.f32 1.0, %v545
    %v547 = vtanh.pop %v540
    %v548 = vmul.f32 %v546, %v478
    %550 = vrot.lane.b32.xlu0 %v547, 64
    %v551 = vpop.permute.xlu0 %550
    %v553 = vmul.f32 %v546, %v551
    %555 = vrot.lane.b32.xlu0 %v553, 32
    %v556 = vpop.permute.xlu0 %555
    %v558 = vadd.f32 %v548, %v556
    %v559 = vtanh.pop %v558
    %561 = vrot.lane.b32.xlu0 %v559, 64
    %v562 = vpop.permute.xlu0 %561
    %v564 = vmul.f32 %v546, %v562
    %566 = vrot.lane.b32.xlu0 %v564, 32
    %v567 = vpop.permute.xlu0 %566
    %s569 = scalar_lea.vmem [#allocation3], 4
    %570 = vst.msk [vmem:[%s569] sm:$0x3] %vm409, %v567
    %s571 = scalar_lea.vmem [#allocation2], 6
    %v572 = vld [vmem:[%s571] sm:$0x3]
    %v573 = vpack.c.bf16 %v564, %v564
    %575 = vrot.lane.b32.xlu0 %v573, 32
    %v576 = vpop.permute.xlu0 %575
    %v578 = vsel %vm336, %v576, 0
    %580 = vmatprep.subr.bf16.mxu0 0
    %581 = vmatpush1.bf16.msra.mxu0 0
    %582 = vmatprep.subr.bf16.mxu0 0
    %583 = vmatpush1.bf16.msra.mxu0 0
    %584 = vmatprep.subr.bf16.mxu0 0
    %585 = vmatpush1.bf16.msra.mxu0 0
    %586 = vmatprep.subr.bf16.mxu0 0
    %587 = vmatpush1.bf16.msra.mxu0 0
    %588 = vmatprep.subr.bf16.mxu0 0
    %589 = vmatpush1.bf16.msra.mxu0 0
    %590 = vmatprep.subr.bf16.mxu0 0
    %591 = vmatpush1.bf16.msra.mxu0 0
    %592 = vmatprep.subr.bf16.mxu0 0
    %593 = vmatpush1.bf16.msra.mxu0 %v333
    %594 = vmatprep.subr.bf16.mxu0 0
    %595 = vmatpush1.bf16.msra.mxu0 %v332
    %596 = vmatprep.subr.bf16.mxu0 0
    %597 = vmatpush2.bf16.msra.mxu0 0
    %598 = vmatprep.subr.bf16.mxu0 0
    %599 = vmatpush2.bf16.msra.mxu0 0
    %600 = vmatprep.subr.bf16.mxu0 0
    %601 = vmatpush2.bf16.msra.mxu0 0
    %602 = vmatprep.subr.bf16.mxu0 0
    %603 = vmatpush2.bf16.msra.mxu0 0
    %604 = vmatprep.subr.bf16.mxu0 0
    %605 = vmatpush2.bf16.msra.mxu0 0
    %606 = vmatprep.subr.bf16.mxu0 0
    %607 = vmatpush2.bf16.msra.mxu0 0
    %608 = vmatprep.subr.bf16.mxu0 0
    %609 = vmatpush2.bf16.msra.mxu0 0
    %610 = vmatprep.subr.bf16.mxu0 0
    %611 = vmatpush2.bf16.msra.mxu0 0
    %612 = vmatprep.mubr.bf16.mxu0 0
    %613 = vmatmul.mubr.bf16.gmra.mxu0 %v578
    %v614 = vpop.f32.mrf.mxu0
    %v615 = vadd.f32 0.0, %v614
    %v616 = vpop.f32.mrf.mxu0
    %v617 = vpop.f32.mrf.mxu0
    %v618 = vpop.f32.mrf.mxu0
    %619 = vdwg.mxu0
    %v620 = vadd.f32 %v572, %v615
    %v621 = vxor.u32 %v620, 2147483648
    %v622 = vmul.f32 %v621, 1.442695
    %v623 = vpow.pop %v622
    %v624 = vadd.f32 %v623, 1.0
    %v625 = vrcp.pop %v624
    %v626 = vmul.f32 1.0, %v625
    %v627 = vtanh.pop %v620
    %v628 = vmul.f32 %v626, %v558
    %630 = vrot.lane.b32.xlu0 %v627, 64
    %v631 = vpop.permute.xlu0 %630
    %v633 = vmul.f32 %v626, %v631
    %635 = vrot.lane.b32.xlu0 %v633, 32
    %v636 = vpop.permute.xlu0 %635
    %v638 = vadd.f32 %v628, %v636
    %v639 = vtanh.pop %v638
    %641 = vrot.lane.b32.xlu0 %v639, 64
    %v642 = vpop.permute.xlu0 %641
    %v644 = vmul.f32 %v626, %v642
    %646 = vrot.lane.b32.xlu0 %v644, 32
    %v647 = vpop.permute.xlu0 %646
    %s649 = scalar_lea.vmem [#allocation3], 6
    %650 = vst.msk [vmem:[%s649] sm:$0x3] %vm409, %v647
    %s651 = scalar_lea.vmem [#allocation2], 8
    %v652 = vld [vmem:[%s651] sm:$0x3]
    %v653 = vpack.c.bf16 %v644, %v644
    %655 = vrot.lane.b32.xlu0 %v653, 32
    %v656 = vpop.permute.xlu0 %655
    %v658 = vsel %vm336, %v656, 0
    %660 = vmatprep.subr.bf16.mxu0 0
    %661 = vmatpush1.bf16.msra.mxu0 0
    %662 = vmatprep.subr.bf16.mxu0 0
    %663 = vmatpush1.bf16.msra.mxu0 0
    %664 = vmatprep.subr.bf16.mxu0 0
    %665 = vmatpush1.bf16.msra.mxu0 0
    %666 = vmatprep.subr.bf16.mxu0 0
    %667 = vmatpush1.bf16.msra.mxu0 0
    %668 = vmatprep.subr.bf16.mxu0 0
    %669 = vmatpush1.bf16.msra.mxu0 0
    %670 = vmatprep.subr.bf16.mxu0 0
    %671 = vmatpush1.bf16.msra.mxu0 0
    %672 = vmatprep.subr.bf16.mxu0 0
    %673 = vmatpush1.bf16.msra.mxu0 %v333
    %674 = vmatprep.subr.bf16.mxu0 0
    %675 = vmatpush1.bf16.msra.mxu0 %v332
    %676 = vmatprep.subr.bf16.mxu0 0
    %677 = vmatpush2.bf16.msra.mxu0 0
    %678 = vmatprep.subr.bf16.mxu0 0
    %679 = vmatpush2.bf16.msra.mxu0 0
    %680 = vmatprep.subr.bf16.mxu0 0
    %681 = vmatpush2.bf16.msra.mxu0 0
    %682 = vmatprep.subr.bf16.mxu0 0
    %683 = vmatpush2.bf16.msra.mxu0 0
    %684 = vmatprep.subr.bf16.mxu0 0
    %685 = vmatpush2.bf16.msra.mxu0 0
    %686 = vmatprep.subr.bf16.mxu0 0
    %687 = vmatpush2.bf16.msra.mxu0 0
    %688 = vmatprep.subr.bf16.mxu0 0
    %689 = vmatpush2.bf16.msra.mxu0 0
    %690 = vmatprep.subr.bf16.mxu0 0
    %691 = vmatpush2.bf16.msra.mxu0 0
    %692 = vmatprep.mubr.bf16.mxu0 0
    %693 = vmatmul.mubr.bf16.gmra.mxu0 %v658
    %v694 = vpop.f32.mrf.mxu0
    %v695 = vadd.f32 0.0, %v694
    %v696 = vpop.f32.mrf.mxu0
    %v697 = vpop.f32.mrf.mxu0
    %v698 = vpop.f32.mrf.mxu0
    %699 = vdwg.mxu0
    %v700 = vadd.f32 %v652, %v695
    %v701 = vxor.u32 %v700, 2147483648
    %v702 = vmul.f32 %v701, 1.442695
    %v703 = vpow.pop %v702
    %v704 = vadd.f32 %v703, 1.0
    %v705 = vrcp.pop %v704
    %v706 = vmul.f32 1.0, %v705
    %v707 = vtanh.pop %v700
    %v708 = vmul.f32 %v706, %v638
    %710 = vrot.lane.b32.xlu0 %v707, 64
    %v711 = vpop.permute.xlu0 %710
    %v713 = vmul.f32 %v706, %v711
    %715 = vrot.lane.b32.xlu0 %v713, 32
    %v716 = vpop.permute.xlu0 %715
    %v718 = vadd.f32 %v708, %v716
    %v719 = vtanh.pop %v718
    %721 = vrot.lane.b32.xlu0 %v719, 64
    %v722 = vpop.permute.xlu0 %721
    %v724 = vmul.f32 %v706, %v722
    %726 = vrot.lane.b32.xlu0 %v724, 32
    %v727 = vpop.permute.xlu0 %726
    %s729 = scalar_lea.vmem [#allocation3], 8
    %730 = vst.msk [vmem:[%s729] sm:$0x3] %vm409, %v727
    %s731 = scalar_lea.vmem [#allocation2], 10
    %v732 = vld [vmem:[%s731] sm:$0x3]
    %v733 = vpack.c.bf16 %v724, %v724
    %735 = vrot.lane.b32.xlu0 %v733, 32
    %v736 = vpop.permute.xlu0 %735
    %v738 = vsel %vm336, %v736, 0
    %740 = vmatprep.subr.bf16.mxu0 0
    %741 = vmatpush1.bf16.msra.mxu0 0
    %742 = vmatprep.subr.bf16.mxu0 0
    %743 = vmatpush1.bf16.msra.mxu0 0
    %744 = vmatprep.subr.bf16.mxu0 0
    %745 = vmatpush1.bf16.msra.mxu0 0
    %746 = vmatprep.subr.bf16.mxu0 0
    %747 = vmatpush1.bf16.msra.mxu0 0
    %748 = vmatprep.subr.bf16.mxu0 0
    %749 = vmatpush1.bf16.msra.mxu0 0
    %750 = vmatprep.subr.bf16.mxu0 0
    %751 = vmatpush1.bf16.msra.mxu0 0
    %752 = vmatprep.subr.bf16.mxu0 0
    %753 = vmatpush1.bf16.msra.mxu0 %v333
    %754 = vmatprep.subr.bf16.mxu0 0
    %755 = vmatpush1.bf16.msra.mxu0 %v332
    %756 = vmatprep.subr.bf16.mxu0 0
    %757 = vmatpush2.bf16.msra.mxu0 0
    %758 = vmatprep.subr.bf16.mxu0 0
    %759 = vmatpush2.bf16.msra.mxu0 0
    %760 = vmatprep.subr.bf16.mxu0 0
    %761 = vmatpush2.bf16.msra.mxu0 0
    %762 = vmatprep.subr.bf16.mxu0 0
    %763 = vmatpush2.bf16.msra.mxu0 0
    %764 = vmatprep.subr.bf16.mxu0 0
    %765 = vmatpush2.bf16.msra.mxu0 0
    %766 = vmatprep.subr.bf16.mxu0 0
    %767 = vmatpush2.bf16.msra.mxu0 0
    %768 = vmatprep.subr.bf16.mxu0 0
    %769 = vmatpush2.bf16.msra.mxu0 0
    %770 = vmatprep.subr.bf16.mxu0 0
    %771 = vmatpush2.bf16.msra.mxu0 0
    %772 = vmatprep.mubr.bf16.mxu0 0
    %773 = vmatmul.mubr.bf16.gmra.mxu0 %v738
    %v774 = vpop.f32.mrf.mxu0
    %v775 = vadd.f32 0.0, %v774
    %v776 = vpop.f32.mrf.mxu0
    %v777 = vpop.f32.mrf.mxu0
    %v778 = vpop.f32.mrf.mxu0
    %779 = vdwg.mxu0
    %v780 = vadd.f32 %v732, %v775
    %v781 = vxor.u32 %v780, 2147483648
    %v782 = vmul.f32 %v781, 1.442695
    %v783 = vpow.pop %v782
    %v784 = vadd.f32 %v783, 1.0
    %v785 = vrcp.pop %v784
    %v786 = vmul.f32 1.0, %v785
    %v787 = vtanh.pop %v780
    %v788 = vmul.f32 %v786, %v718
    %790 = vrot.lane.b32.xlu0 %v787, 64
    %v791 = vpop.permute.xlu0 %790
    %v793 = vmul.f32 %v786, %v791
    %795 = vrot.lane.b32.xlu0 %v793, 32
    %v796 = vpop.permute.xlu0 %795
    %v798 = vadd.f32 %v788, %v796
    %v799 = vtanh.pop %v798
    %801 = vrot.lane.b32.xlu0 %v799, 64
    %v802 = vpop.permute.xlu0 %801
    %v804 = vmul.f32 %v786, %v802
    %806 = vrot.lane.b32.xlu0 %v804, 32
    %v807 = vpop.permute.xlu0 %806
    %s809 = scalar_lea.vmem [#allocation3], 10
    %810 = vst.msk [vmem:[%s809] sm:$0x3] %vm409, %v807
    %s811 = scalar_lea.vmem [#allocation2], 12
    %v812 = vld [vmem:[%s811] sm:$0x3]
    %v813 = vpack.c.bf16 %v804, %v804
    %815 = vrot.lane.b32.xlu0 %v813, 32
    %v816 = vpop.permute.xlu0 %815
    %v818 = vsel %vm336, %v816, 0
    %820 = vmatprep.subr.bf16.mxu0 0
    %821 = vmatpush1.bf16.msra.mxu0 0
    %822 = vmatprep.subr.bf16.mxu0 0
    %823 = vmatpush1.bf16.msra.mxu0 0
    %824 = vmatprep.subr.bf16.mxu0 0
    %825 = vmatpush1.bf16.msra.mxu0 0
    %826 = vmatprep.subr.bf16.mxu0 0
    %827 = vmatpush1.bf16.msra.mxu0 0
    %828 = vmatprep.subr.bf16.mxu0 0
    %829 = vmatpush1.bf16.msra.mxu0 0
    %830 = vmatprep.subr.bf16.mxu0 0
    %831 = vmatpush1.bf16.msra.mxu0 0
    %832 = vmatprep.subr.bf16.mxu0 0
    %833 = vmatpush1.bf16.msra.mxu0 %v333
    %834 = vmatprep.subr.bf16.mxu0 0
    %835 = vmatpush1.bf16.msra.mxu0 %v332
    %836 = vmatprep.subr.bf16.mxu0 0
    %837 = vmatpush2.bf16.msra.mxu0 0
    %838 = vmatprep.subr.bf16.mxu0 0
    %839 = vmatpush2.bf16.msra.mxu0 0
    %840 = vmatprep.subr.bf16.mxu0 0
    %841 = vmatpush2.bf16.msra.mxu0 0
    %842 = vmatprep.subr.bf16.mxu0 0
    %843 = vmatpush2.bf16.msra.mxu0 0
    %844 = vmatprep.subr.bf16.mxu0 0
    %845 = vmatpush2.bf16.msra.mxu0 0
    %846 = vmatprep.subr.bf16.mxu0 0
    %847 = vmatpush2.bf16.msra.mxu0 0
    %848 = vmatprep.subr.bf16.mxu0 0
    %849 = vmatpush2.bf16.msra.mxu0 0
    %850 = vmatprep.subr.bf16.mxu0 0
    %851 = vmatpush2.bf16.msra.mxu0 0
    %852 = vmatprep.mubr.bf16.mxu0 0
    %853 = vmatmul.mubr.bf16.gmra.mxu0 %v818
    %v854 = vpop.f32.mrf.mxu0
    %v855 = vadd.f32 0.0, %v854
    %v856 = vpop.f32.mrf.mxu0
    %v857 = vpop.f32.mrf.mxu0
    %v858 = vpop.f32.mrf.mxu0
    %859 = vdwg.mxu0
    %v860 = vadd.f32 %v812, %v855
    %v861 = vxor.u32 %v860, 2147483648
    %v862 = vmul.f32 %v861, 1.442695
    %v863 = vpow.pop %v862
    %v864 = vadd.f32 %v863, 1.0
    %v865 = vrcp.pop %v864
    %v866 = vmul.f32 1.0, %v865
    %v867 = vtanh.pop %v860
    %v868 = vmul.f32 %v866, %v798
    %870 = vrot.lane.b32.xlu0 %v867, 64
    %v871 = vpop.permute.xlu0 %870
    %v873 = vmul.f32 %v866, %v871
    %875 = vrot.lane.b32.xlu0 %v873, 32
    %v876 = vpop.permute.xlu0 %875
    %v878 = vadd.f32 %v868, %v876
    %v879 = vtanh.pop %v878
    %881 = vrot.lane.b32.xlu0 %v879, 64
    %v882 = vpop.permute.xlu0 %881
    %v884 = vmul.f32 %v866, %v882
    %886 = vrot.lane.b32.xlu0 %v884, 32
    %v887 = vpop.permute.xlu0 %886
    %s889 = scalar_lea.vmem [#allocation3], 12
    %890 = vst.msk [vmem:[%s889] sm:$0x3] %vm409, %v887
    %s891 = scalar_lea.vmem [#allocation2], 14
    %v892 = vld [vmem:[%s891] sm:$0x3]
    %v893 = vpack.c.bf16 %v884, %v884
    %895 = vrot.lane.b32.xlu0 %v893, 32
    %v896 = vpop.permute.xlu0 %895
    %v898 = vsel %vm336, %v896, 0
    %900 = vmatprep.subr.bf16.mxu0 0
    %901 = vmatpush1.bf16.msra.mxu0 0
    %902 = vmatprep.subr.bf16.mxu0 0
    %903 = vmatpush1.bf16.msra.mxu0 0
    %904 = vmatprep.subr.bf16.mxu0 0
    %905 = vmatpush1.bf16.msra.mxu0 0
    %906 = vmatprep.subr.bf16.mxu0 0
    %907 = vmatpush1.bf16.msra.mxu0 0
    %908 = vmatprep.subr.bf16.mxu0 0
    %909 = vmatpush1.bf16.msra.mxu0 0
    %910 = vmatprep.subr.bf16.mxu0 0
    %911 = vmatpush1.bf16.msra.mxu0 0
    %912 = vmatprep.subr.bf16.mxu0 0
    %913 = vmatpush1.bf16.msra.mxu0 %v333
    %914 = vmatprep.subr.bf16.mxu0 0
    %915 = vmatpush1.bf16.msra.mxu0 %v332
    %916 = vmatprep.subr.bf16.mxu0 0
    %917 = vmatpush2.bf16.msra.mxu0 0
    %918 = vmatprep.subr.bf16.mxu0 0
    %919 = vmatpush2.bf16.msra.mxu0 0
    %920 = vmatprep.subr.bf16.mxu0 0
    %921 = vmatpush2.bf16.msra.mxu0 0
    %922 = vmatprep.subr.bf16.mxu0 0
    %923 = vmatpush2.bf16.msra.mxu0 0
    %924 = vmatprep.subr.bf16.mxu0 0
    %925 = vmatpush2.bf16.msra.mxu0 0
    %926 = vmatprep.subr.bf16.mxu0 0
    %927 = vmatpush2.bf16.msra.mxu0 0
    %928 = vmatprep.subr.bf16.mxu0 0
    %929 = vmatpush2.bf16.msra.mxu0 0
    %930 = vmatprep.subr.bf16.mxu0 0
    %931 = vmatpush2.bf16.msra.mxu0 0
    %932 = vmatprep.mubr.bf16.mxu0 0
    %933 = vmatmul.mubr.bf16.gmra.mxu0 %v898
    %v934 = vpop.f32.mrf.mxu0
    %v935 = vadd.f32 0.0, %v934
    %v936 = vpop.f32.mrf.mxu0
    %v937 = vpop.f32.mrf.mxu0
    %v938 = vpop.f32.mrf.mxu0
    %939 = vdwg.mxu0
    %v940 = vadd.f32 %v892, %v935
    %v941 = vxor.u32 %v940, 2147483648
    %v942 = vmul.f32 %v941, 1.442695
    %v943 = vpow.pop %v942
    %v944 = vadd.f32 %v943, 1.0
    %v945 = vrcp.pop %v944
    %v946 = vmul.f32 1.0, %v945
    %v947 = vtanh.pop %v940
    %v948 = vmul.f32 %v946, %v878
    %950 = vrot.lane.b32.xlu0 %v947, 64
    %v951 = vpop.permute.xlu0 %950
    %v953 = vmul.f32 %v946, %v951
    %955 = vrot.lane.b32.xlu0 %v953, 32
    %v956 = vpop.permute.xlu0 %955
    %v958 = vadd.f32 %v948, %v956
    %v959 = vtanh.pop %v958
    %961 = vrot.lane.b32.xlu0 %v959, 64
    %v962 = vpop.permute.xlu0 %961
    %v964 = vmul.f32 %v946, %v962
    %966 = vrot.lane.b32.xlu0 %v964, 32
    %v967 = vpop.permute.xlu0 %966
    %s969 = scalar_lea.vmem [#allocation3], 14
    %970 = vst.msk [vmem:[%s969] sm:$0x3] %vm409, %v967
    %v971 = vld [vmem:[#allocation8] sm:$0xf]
    %v972 = vld [vmem:[#allocation8 + $0x4] sm:$0xf]
    %v973 = vld [vmem:[#allocation8 + $0x8] sm:$0xf]
    %v974 = vld [vmem:[#allocation8 + $0xc] sm:$0xf]
    %v975 = vld [vmem:[#allocation9] sm:$0xf]
    %v976 = vld [vmem:[#allocation9 + $0x4] sm:$0xf]
    %v977 = vld [vmem:[#allocation9 + $0x8] sm:$0xf]
    %v978 = vld [vmem:[#allocation9 + $0xc] sm:$0xf]
    %v979 = vld [vmem:[%s6] sm:$0x1]
    %v980 = vld [vmem:[#allocation3] sm:$0x1]
    %v981 = vld [vmem:[#allocation3 + $0x2] sm:$0x1]
    %v982 = vld [vmem:[#allocation3 + $0x4] sm:$0x1]
    %v983 = vld [vmem:[#allocation3 + $0x6] sm:$0x1]
    %v984 = vld [vmem:[#allocation3 + $0x8] sm:$0x1]
    %v985 = vld [vmem:[#allocation3 + $0xa] sm:$0x1]
    %v986 = vld [vmem:[#allocation3 + $0xc] sm:$0x1]
    %v987 = vld [vmem:[#allocation3 + $0xe] sm:$0x1]
    %v988 = vpack.c.bf16 %v980, %v980
    %v989 = vpack.c.bf16 %v981, %v981
    %v990 = vpack.c.bf16 %v982, %v982
    %v991 = vpack.c.bf16 %v983, %v983
    %v992 = vpack.c.bf16 %v984, %v984
    %v993 = vpack.c.bf16 %v985, %v985
    %v994 = vpack.c.bf16 %v986, %v986
    %v995 = vpack.c.bf16 %v987, %v987
    %v997 = vlaneseq
    %v998 = vshrl.u32 %v997, 7
    %v999 = vsub.s32 0, %v998
    %v1000 = vrot.slane %v979, %v999
    %v1010 = vunpack.c.l.b16 %v988
    %v1011 = vunpack.c.l.b16 %v989
    %v1012 = vunpack.c.l.b16 %v990
    %v1013 = vunpack.c.l.b16 %v991
    %v1014 = vunpack.c.l.b16 %v992
    %v1015 = vunpack.c.l.b16 %v993
    %v1016 = vunpack.c.l.b16 %v994
    %v1017 = vunpack.c.l.b16 %v995
    %v1018 = vrot.slane %v1011, 7
    %vm1019 = vcmask 1041409
    %v1020 = vsel %vm1019, %v1018, %v1010
    %v1021 = vrot.slane %v1012, 6
    %vm1022 = vcmask 1042434
    %v1023 = vsel %vm1022, %v1021, %v1020
    %v1024 = vrot.slane %v1013, 5
    %vm1025 = vcmask 1043459
    %v1026 = vsel %vm1025, %v1024, %v1023
    %v1027 = vrot.slane %v1014, 4
    %vm1028 = vcmask 1044484
    %v1029 = vsel %vm1028, %v1027, %v1026
    %v1030 = vrot.slane %v1015, 3
    %vm1031 = vcmask 1045509
    %v1032 = vsel %vm1031, %v1030, %v1029
    %v1033 = vrot.slane %v1016, 2
    %vm1034 = vcmask 1046534
    %v1035 = vsel %vm1034, %v1033, %v1032
    %v1036 = vrot.slane %v1017, 1
    %vm1037 = vcmask 1047559
    %v1038 = vsel %vm1037, %v1036, %v1035
    %v1039 = vpack.c.b16 %v1038, %v1038
    %v1044 = vunpack.c.l.b16 %v971
    %v1045 = vunpack.c.l.b16 %v972
    %v1046 = vunpack.c.l.b16 %v973
    %v1047 = vunpack.c.l.b16 %v974
    %v1048 = vpack.c.b16 %v1045, %v1044
    %v1049 = vpack.c.b16 %v1047, %v1046
    %v1053 = vsel %vm336, %v1039, 0
    %1055 = vmatprep.subr.bf16.mxu0 0
    %1056 = vmatpush1.bf16.msra.mxu0 0
    %1057 = vmatprep.subr.bf16.mxu0 0
    %1058 = vmatpush1.bf16.msra.mxu0 0
    %1059 = vmatprep.subr.bf16.mxu0 0
    %1060 = vmatpush1.bf16.msra.mxu0 0
    %1061 = vmatprep.subr.bf16.mxu0 0
    %1062 = vmatpush1.bf16.msra.mxu0 0
    %1063 = vmatprep.subr.bf16.mxu0 0
    %1064 = vmatpush1.bf16.msra.mxu0 0
    %1065 = vmatprep.subr.bf16.mxu0 0
    %1066 = vmatpush1.bf16.msra.mxu0 0
    %1067 = vmatprep.subr.bf16.mxu0 0
    %1068 = vmatpush1.bf16.msra.mxu0 %v1049
    %1069 = vmatprep.subr.bf16.mxu0 0
    %1070 = vmatpush1.bf16.msra.mxu0 %v1048
    %1071 = vmatprep.subr.bf16.mxu0 0
    %1072 = vmatpush2.bf16.msra.mxu0 0
    %1073 = vmatprep.subr.bf16.mxu0 0
    %1074 = vmatpush2.bf16.msra.mxu0 0
    %1075 = vmatprep.subr.bf16.mxu0 0
    %1076 = vmatpush2.bf16.msra.mxu0 0
    %1077 = vmatprep.subr.bf16.mxu0 0
    %1078 = vmatpush2.bf16.msra.mxu0 0
    %1079 = vmatprep.subr.bf16.mxu0 0
    %1080 = vmatpush2.bf16.msra.mxu0 0
    %1081 = vmatprep.subr.bf16.mxu0 0
    %1082 = vmatpush2.bf16.msra.mxu0 0
    %1083 = vmatprep.subr.bf16.mxu0 0
    %1084 = vmatpush2.bf16.msra.mxu0 0
    %1085 = vmatprep.subr.bf16.mxu0 0
    %1086 = vmatpush2.bf16.msra.mxu0 0
    %1087 = vmatprep.mubr.bf16.mxu0 0
    %1088 = vmatmul.mubr.bf16.gmra.mxu0 %v1053
    %v1089 = vpop.f32.mrf.mxu0
    %v1090 = vadd.f32 %v1000, %v1089
    %v1091 = vpop.f32.mrf.mxu0
    %v1092 = vpop.f32.mrf.mxu0
    %v1093 = vpop.f32.mrf.mxu0
    %1094 = vdwg.mxu0
    %v1096 = vcombine.high %v1090, %v1090
    %v1098 = vunpack.c.l.s4 1966171168
    %v1099 = vunpack.c.0.s8 %v1098
    %v1100 = vlaneseq
    %v1101 = vshrl.u32 %v1100, 7
    %v1102 = vsub.s32 %v1099, %v1101
    %v1103 = vrot.slane %v1090, %v1102
    %v1105 = vunpack.c.l.s4 1966171168
    %v1106 = vunpack.c.0.s8 %v1105
    %v1107 = vlaneseq
    %v1108 = vshrl.u32 %v1107, 7
    %v1109 = vsub.s32 %v1106, %v1108
    %v1110 = vrot.slane %v1096, %v1109
    %v1111 = vcombine.high %v1103, %v1103
    %v1112 = vcombine.high %v1110, %v1110
    %v1114 = vunpack.c.l.s4 1966171168
    %v1115 = vunpack.c.0.s8 %v1114
    %v1116 = vlaneseq
    %v1117 = vshrl.u32 %v1116, 7
    %v1118 = vsub.s32 %v1115, %v1117
    %v1119 = vrot.slane %v1103, %v1118
    %v1121 = vunpack.c.l.s4 1966171168
    %v1122 = vunpack.c.0.s8 %v1121
    %v1123 = vlaneseq
    %v1124 = vshrl.u32 %v1123, 7
    %v1125 = vsub.s32 %v1122, %v1124
    %v1126 = vrot.slane %v1110, %v1125
    %v1128 = vunpack.c.l.s4 1966171168
    %v1129 = vunpack.c.0.s8 %v1128
    %v1130 = vlaneseq
    %v1131 = vshrl.u32 %v1130, 7
    %v1132 = vsub.s32 %v1129, %v1131
    %v1133 = vrot.slane %v1111, %v1132
    %v1135 = vunpack.c.l.s4 1966171168
    %v1136 = vunpack.c.0.s8 %v1135
    %v1137 = vlaneseq
    %v1138 = vshrl.u32 %v1137, 7
    %v1139 = vsub.s32 %v1136, %v1138
    %v1140 = vrot.slane %v1112, %v1139
    %v1141 = vcombine.high %v1119, %v1119
    %v1142 = vcombine.high %v1126, %v1126
    %v1143 = vcombine.high %v1133, %v1133
    %v1144 = vcombine.high %v1140, %v1140
    %1153 = vst [vmem:[#allocation2] sm:$0x1] %v1119
    %1154 = vst [vmem:[#allocation2 + $0x2] sm:$0x1] %v1133
    %1155 = vst [vmem:[#allocation2 + $0x4] sm:$0x1] %v1141
    %1156 = vst [vmem:[#allocation2 + $0x6] sm:$0x1] %v1143
    %1157 = vst [vmem:[#allocation2 + $0x8] sm:$0x1] %v1126
    %1158 = vst [vmem:[#allocation2 + $0xa] sm:$0x1] %v1140
    %1159 = vst [vmem:[#allocation2 + $0xc] sm:$0x1] %v1142
    %1160 = vst [vmem:[#allocation2 + $0xe] sm:$0x1] %v1144
    %v1161 = vld [vmem:[#allocation3 + $0x1] sm:$0x1]
    %v1162 = vld [vmem:[#allocation3 + $0x3] sm:$0x1]
    %v1163 = vld [vmem:[#allocation3 + $0x5] sm:$0x1]
    %v1164 = vld [vmem:[#allocation3 + $0x7] sm:$0x1]
    %v1165 = vld [vmem:[#allocation3 + $0x9] sm:$0x1]
    %v1166 = vld [vmem:[#allocation3 + $0xb] sm:$0x1]
    %v1167 = vld [vmem:[#allocation3 + $0xd] sm:$0x1]
    %v1168 = vld [vmem:[#allocation3 + $0xf] sm:$0x1]
    %v1169 = vpack.c.bf16 %v1161, %v1161
    %v1170 = vpack.c.bf16 %v1162, %v1162
    %v1171 = vpack.c.bf16 %v1163, %v1163
    %v1172 = vpack.c.bf16 %v1164, %v1164
    %v1173 = vpack.c.bf16 %v1165, %v1165
    %v1174 = vpack.c.bf16 %v1166, %v1166
    %v1175 = vpack.c.bf16 %v1167, %v1167
    %v1176 = vpack.c.bf16 %v1168, %v1168
    %v1185 = vunpack.c.l.b16 %v1169
    %v1186 = vunpack.c.l.b16 %v1170
    %v1187 = vunpack.c.l.b16 %v1171
    %v1188 = vunpack.c.l.b16 %v1172
    %v1189 = vunpack.c.l.b16 %v1173
    %v1190 = vunpack.c.l.b16 %v1174
    %v1191 = vunpack.c.l.b16 %v1175
    %v1192 = vunpack.c.l.b16 %v1176
    %v1193 = vrot.slane %v1186, 7
    %v1194 = vsel %vm1019, %v1193, %v1185
    %v1195 = vrot.slane %v1187, 6
    %v1196 = vsel %vm1022, %v1195, %v1194
    %v1197 = vrot.slane %v1188, 5
    %v1198 = vsel %vm1025, %v1197, %v1196
    %v1199 = vrot.slane %v1189, 4
    %v1200 = vsel %vm1028, %v1199, %v1198
    %v1201 = vrot.slane %v1190, 3
    %v1202 = vsel %vm1031, %v1201, %v1200
    %v1203 = vrot.slane %v1191, 2
    %v1204 = vsel %vm1034, %v1203, %v1202
    %v1205 = vrot.slane %v1192, 1
    %v1206 = vsel %vm1037, %v1205, %v1204
    %v1207 = vpack.c.b16 %v1206, %v1206
    %v1209 = vsel %vm336, %v1207, 0
    %1211 = vmatprep.subr.bf16.mxu0 0
    %1212 = vmatpush1.bf16.msra.mxu0 0
    %1213 = vmatprep.subr.bf16.mxu0 0
    %1214 = vmatpush1.bf16.msra.mxu0 0
    %1215 = vmatprep.subr.bf16.mxu0 0
    %1216 = vmatpush1.bf16.msra.mxu0 0
    %1217 = vmatprep.subr.bf16.mxu0 0
    %1218 = vmatpush1.bf16.msra.mxu0 0
    %1219 = vmatprep.subr.bf16.mxu0 0
    %1220 = vmatpush1.bf16.msra.mxu0 0
    %1221 = vmatprep.subr.bf16.mxu0 0
    %1222 = vmatpush1.bf16.msra.mxu0 0
    %1223 = vmatprep.subr.bf16.mxu0 0
    %1224 = vmatpush1.bf16.msra.mxu0 %v1049
    %1225 = vmatprep.subr.bf16.mxu0 0
    %1226 = vmatpush1.bf16.msra.mxu0 %v1048
    %1227 = vmatprep.subr.bf16.mxu0 0
    %1228 = vmatpush2.bf16.msra.mxu0 0
    %1229 = vmatprep.subr.bf16.mxu0 0
    %1230 = vmatpush2.bf16.msra.mxu0 0
    %1231 = vmatprep.subr.bf16.mxu0 0
    %1232 = vmatpush2.bf16.msra.mxu0 0
    %1233 = vmatprep.subr.bf16.mxu0 0
    %1234 = vmatpush2.bf16.msra.mxu0 0
    %1235 = vmatprep.subr.bf16.mxu0 0
    %1236 = vmatpush2.bf16.msra.mxu0 0
    %1237 = vmatprep.subr.bf16.mxu0 0
    %1238 = vmatpush2.bf16.msra.mxu0 0
    %1239 = vmatprep.subr.bf16.mxu0 0
    %1240 = vmatpush2.bf16.msra.mxu0 0
    %1241 = vmatprep.subr.bf16.mxu0 0
    %1242 = vmatpush2.bf16.msra.mxu0 0
    %1243 = vmatprep.mubr.bf16.mxu0 0
    %1244 = vmatmul.mubr.bf16.gmra.mxu0 %v1209
    %v1245 = vpop.f32.mrf.mxu0
    %v1246 = vadd.f32 %v1000, %v1245
    %v1247 = vpop.f32.mrf.mxu0
    %v1248 = vpop.f32.mrf.mxu0
    %v1249 = vpop.f32.mrf.mxu0
    %1250 = vdwg.mxu0
    %v1252 = vcombine.high %v1246, %v1246
    %v1254 = vunpack.c.l.s4 1966171168
    %v1255 = vunpack.c.0.s8 %v1254
    %v1256 = vlaneseq
    %v1257 = vshrl.u32 %v1256, 7
    %v1258 = vsub.s32 %v1255, %v1257
    %v1259 = vrot.slane %v1246, %v1258
    %v1261 = vunpack.c.l.s4 1966171168
    %v1262 = vunpack.c.0.s8 %v1261
    %v1263 = vlaneseq
    %v1264 = vshrl.u32 %v1263, 7
    %v1265 = vsub.s32 %v1262, %v1264
    %v1266 = vrot.slane %v1252, %v1265
    %v1267 = vcombine.high %v1259, %v1259
    %v1268 = vcombine.high %v1266, %v1266
    %v1270 = vunpack.c.l.s4 1966171168
    %v1271 = vunpack.c.0.s8 %v1270
    %v1272 = vlaneseq
    %v1273 = vshrl.u32 %v1272, 7
    %v1274 = vsub.s32 %v1271, %v1273
    %v1275 = vrot.slane %v1259, %v1274
    %v1277 = vunpack.c.l.s4 1966171168
    %v1278 = vunpack.c.0.s8 %v1277
    %v1279 = vlaneseq
    %v1280 = vshrl.u32 %v1279, 7
    %v1281 = vsub.s32 %v1278, %v1280
    %v1282 = vrot.slane %v1266, %v1281
    %v1284 = vunpack.c.l.s4 1966171168
    %v1285 = vunpack.c.0.s8 %v1284
    %v1286 = vlaneseq
    %v1287 = vshrl.u32 %v1286, 7
    %v1288 = vsub.s32 %v1285, %v1287
    %v1289 = vrot.slane %v1267, %v1288
    %v1291 = vunpack.c.l.s4 1966171168
    %v1292 = vunpack.c.0.s8 %v1291
    %v1293 = vlaneseq
    %v1294 = vshrl.u32 %v1293, 7
    %v1295 = vsub.s32 %v1292, %v1294
    %v1296 = vrot.slane %v1268, %v1295
    %v1297 = vcombine.high %v1275, %v1275
    %v1298 = vcombine.high %v1282, %v1282
    %v1299 = vcombine.high %v1289, %v1289
    %v1300 = vcombine.high %v1296, %v1296
    %1309 = vst [vmem:[#allocation2 + $0x1] sm:$0x1] %v1275
    %1310 = vst [vmem:[#allocation2 + $0x3] sm:$0x1] %v1289
    %1311 = vst [vmem:[#allocation2 + $0x5] sm:$0x1] %v1297
    %1312 = vst [vmem:[#allocation2 + $0x7] sm:$0x1] %v1299
    %1313 = vst [vmem:[#allocation2 + $0x9] sm:$0x1] %v1282
    %1314 = vst [vmem:[#allocation2 + $0xb] sm:$0x1] %v1296
    %1315 = vst [vmem:[#allocation2 + $0xd] sm:$0x1] %v1298
    %1316 = vst [vmem:[#allocation2 + $0xf] sm:$0x1] %v1300
    %v1317 = vld [vmem:[#allocation2] sm:$0x3]
    %v1322 = vunpack.c.l.b16 %v975
    %v1323 = vunpack.c.l.b16 %v976
    %v1324 = vunpack.c.l.b16 %v977
    %v1325 = vunpack.c.l.b16 %v978
    %v1326 = vpack.c.b16 %v1323, %v1322
    %v1327 = vpack.c.b16 %v1325, %v1324
    %1330 = vmatprep.subr.bf16.mxu0 0
    %1331 = vmatpush1.bf16.msra.mxu0 0
    %1332 = vmatprep.subr.bf16.mxu0 0
    %1333 = vmatpush1.bf16.msra.mxu0 0
    %1334 = vmatprep.subr.bf16.mxu0 0
    %1335 = vmatpush1.bf16.msra.mxu0 0
    %1336 = vmatprep.subr.bf16.mxu0 0
    %1337 = vmatpush1.bf16.msra.mxu0 0
    %1338 = vmatprep.subr.bf16.mxu0 0
    %1339 = vmatpush1.bf16.msra.mxu0 0
    %1340 = vmatprep.subr.bf16.mxu0 0
    %1341 = vmatpush1.bf16.msra.mxu0 0
    %1342 = vmatprep.subr.bf16.mxu0 0
    %1343 = vmatpush1.bf16.msra.mxu0 %v1327
    %1344 = vmatprep.subr.bf16.mxu0 0
    %1345 = vmatpush1.bf16.msra.mxu0 %v1326
    %1346 = vmatprep.subr.bf16.mxu0 0
    %1347 = vmatpush2.bf16.msra.mxu0 0
    %1348 = vmatprep.subr.bf16.mxu0 0
    %1349 = vmatpush2.bf16.msra.mxu0 0
    %1350 = vmatprep.subr.bf16.mxu0 0
    %1351 = vmatpush2.bf16.msra.mxu0 0
    %1352 = vmatprep.subr.bf16.mxu0 0
    %1353 = vmatpush2.bf16.msra.mxu0 0
    %1354 = vmatprep.subr.bf16.mxu0 0
    %1355 = vmatpush2.bf16.msra.mxu0 0
    %1356 = vmatprep.subr.bf16.mxu0 0
    %1357 = vmatpush2.bf16.msra.mxu0 0
    %1358 = vmatprep.subr.bf16.mxu0 0
    %1359 = vmatpush2.bf16.msra.mxu0 0
    %1360 = vmatprep.subr.bf16.mxu0 0
    %1361 = vmatpush2.bf16.msra.mxu0 0
    %1362 = vmatprep.mubr.bf16.mxu0 0
    %1363 = vmatmul.mubr.bf16.gmra.mxu0 %v338
    %v1364 = vpop.f32.mrf.mxu0
    %v1365 = vadd.f32 0.0, %v1364
    %v1366 = vpop.f32.mrf.mxu0
    %v1367 = vpop.f32.mrf.mxu0
    %v1368 = vpop.f32.mrf.mxu0
    %1369 = vdwg.mxu0
    %v1370 = vadd.f32 %v1317, %v1365
    %v1371 = vxor.u32 %v1370, 2147483648
    %v1372 = vmul.f32 %v1371, 1.442695
    %v1373 = vpow.pop %v1372
    %v1374 = vadd.f32 %v1373, 1.0
    %v1375 = vrcp.pop %v1374
    %v1376 = vmul.f32 1.0, %v1375
    %v1377 = vtanh.pop %v1370
    %v1378 = vmul.f32 %v1376, 0.0
    %1380 = vrot.lane.b32.xlu0 %v1377, 64
    %v1381 = vpop.permute.xlu0 %1380
    %v1383 = vmul.f32 %v1376, %v1381
    %1385 = vrot.lane.b32.xlu0 %v1383, 32
    %v1386 = vpop.permute.xlu0 %1385
    %v1388 = vadd.f32 %v1378, %v1386
    %v1389 = vtanh.pop %v1388
    %1391 = vrot.lane.b32.xlu0 %v1389, 64
    %v1392 = vpop.permute.xlu0 %1391
    %v1394 = vmul.f32 %v1376, %v1392
    %1396 = vrot.lane.b32.xlu0 %v1394, 32
    %v1397 = vpop.permute.xlu0 %1396
    %1399 = vst.msk [vmem:[#allocation3] sm:$0x3] %vm409, %v1397
    %v1400 = vld [vmem:[%s411] sm:$0x3]
    %v1401 = vpack.c.bf16 %v1394, %v1394
    %1403 = vrot.lane.b32.xlu0 %v1401, 32
    %v1404 = vpop.permute.xlu0 %1403
    %v1406 = vsel %vm336, %v1404, 0
    %1408 = vmatprep.subr.bf16.mxu0 0
    %1409 = vmatpush1.bf16.msra.mxu0 0
    %1410 = vmatprep.subr.bf16.mxu0 0
    %1411 = vmatpush1.bf16.msra.mxu0 0
    %1412 = vmatprep.subr.bf16.mxu0 0
    %1413 = vmatpush1.bf16.msra.mxu0 0
    %1414 = vmatprep.subr.bf16.mxu0 0
    %1415 = vmatpush1.bf16.msra.mxu0 0
    %1416 = vmatprep.subr.bf16.mxu0 0
    %1417 = vmatpush1.bf16.msra.mxu0 0
    %1418 = vmatprep.subr.bf16.mxu0 0
    %1419 = vmatpush1.bf16.msra.mxu0 0
    %1420 = vmatprep.subr.bf16.mxu0 0
    %1421 = vmatpush1.bf16.msra.mxu0 %v1327
    %1422 = vmatprep.subr.bf16.mxu0 0
    %1423 = vmatpush1.bf16.msra.mxu0 %v1326
    %1424 = vmatprep.subr.bf16.mxu0 0
    %1425 = vmatpush2.bf16.msra.mxu0 0
    %1426 = vmatprep.subr.bf16.mxu0 0
    %1427 = vmatpush2.bf16.msra.mxu0 0
    %1428 = vmatprep.subr.bf16.mxu0 0
    %1429 = vmatpush2.bf16.msra.mxu0 0
    %1430 = vmatprep.subr.bf16.mxu0 0
    %1431 = vmatpush2.bf16.msra.mxu0 0
    %1432 = vmatprep.subr.bf16.mxu0 0
    %1433 = vmatpush2.bf16.msra.mxu0 0
    %1434 = vmatprep.subr.bf16.mxu0 0
    %1435 = vmatpush2.bf16.msra.mxu0 0
    %1436 = vmatprep.subr.bf16.mxu0 0
    %1437 = vmatpush2.bf16.msra.mxu0 0
    %1438 = vmatprep.subr.bf16.mxu0 0
    %1439 = vmatpush2.bf16.msra.mxu0 0
    %1440 = vmatprep.mubr.bf16.mxu0 0
    %1441 = vmatmul.mubr.bf16.gmra.mxu0 %v1406
    %v1442 = vpop.f32.mrf.mxu0
    %v1443 = vadd.f32 0.0, %v1442
    %v1444 = vpop.f32.mrf.mxu0
    %v1445 = vpop.f32.mrf.mxu0
    %v1446 = vpop.f32.mrf.mxu0
    %1447 = vdwg.mxu0
    %v1448 = vadd.f32 %v1400, %v1443
    %v1449 = vxor.u32 %v1448, 2147483648
    %v1450 = vmul.f32 %v1449, 1.442695
    %v1451 = vpow.pop %v1450
    %v1452 = vadd.f32 %v1451, 1.0
    %v1453 = vrcp.pop %v1452
    %v1454 = vmul.f32 1.0, %v1453
    %v1455 = vtanh.pop %v1448
    %v1456 = vmul.f32 %v1454, %v1388
    %1458 = vrot.lane.b32.xlu0 %v1455, 64
    %v1459 = vpop.permute.xlu0 %1458
    %v1461 = vmul.f32 %v1454, %v1459
    %1463 = vrot.lane.b32.xlu0 %v1461, 32
    %v1464 = vpop.permute.xlu0 %1463
    %v1466 = vadd.f32 %v1456, %v1464
    %v1467 = vtanh.pop %v1466
    %1469 = vrot.lane.b32.xlu0 %v1467, 64
    %v1470 = vpop.permute.xlu0 %1469
    %v1472 = vmul.f32 %v1454, %v1470
    %1474 = vrot.lane.b32.xlu0 %v1472, 32
    %v1475 = vpop.permute.xlu0 %1474
    %1477 = vst.msk [vmem:[%s489] sm:$0x3] %vm409, %v1475
    %v1478 = vld [vmem:[%s491] sm:$0x3]
    %v1479 = vpack.c.bf16 %v1472, %v1472
    %1481 = vrot.lane.b32.xlu0 %v1479, 32
    %v1482 = vpop.permute.xlu0 %1481
    %v1484 = vsel %vm336, %v1482, 0
    %1486 = vmatprep.subr.bf16.mxu0 0
    %1487 = vmatpush1.bf16.msra.mxu0 0
    %1488 = vmatprep.subr.bf16.mxu0 0
    %1489 = vmatpush1.bf16.msra.mxu0 0
    %1490 = vmatprep.subr.bf16.mxu0 0
    %1491 = vmatpush1.bf16.msra.mxu0 0
    %1492 = vmatprep.subr.bf16.mxu0 0
    %1493 = vmatpush1.bf16.msra.mxu0 0
    %1494 = vmatprep.subr.bf16.mxu0 0
    %1495 = vmatpush1.bf16.msra.mxu0 0
    %1496 = vmatprep.subr.bf16.mxu0 0
    %1497 = vmatpush1.bf16.msra.mxu0 0
    %1498 = vmatprep.subr.bf16.mxu0 0
    %1499 = vmatpush1.bf16.msra.mxu0 %v1327
    %1500 = vmatprep.subr.bf16.mxu0 0
    %1501 = vmatpush1.bf16.msra.mxu0 %v1326
    %1502 = vmatprep.subr.bf16.mxu0 0
    %1503 = vmatpush2.bf16.msra.mxu0 0
    %1504 = vmatprep.subr.bf16.mxu0 0
    %1505 = vmatpush2.bf16.msra.mxu0 0
    %1506 = vmatprep.subr.bf16.mxu0 0
    %1507 = vmatpush2.bf16.msra.mxu0 0
    %1508 = vmatprep.subr.bf16.mxu0 0
    %1509 = vmatpush2.bf16.msra.mxu0 0
    %1510 = vmatprep.subr.bf16.mxu0 0
    %1511 = vmatpush2.bf16.msra.mxu0 0
    %1512 = vmatprep.subr.bf16.mxu0 0
    %1513 = vmatpush2.bf16.msra.mxu0 0
    %1514 = vmatprep.subr.bf16.mxu0 0
    %1515 = vmatpush2.bf16.msra.mxu0 0
    %1516 = vmatprep.subr.bf16.mxu0 0
    %1517 = vmatpush2.bf16.msra.mxu0 0
    %1518 = vmatprep.mubr.bf16.mxu0 0
    %1519 = vmatmul.mubr.bf16.gmra.mxu0 %v1484
    %v1520 = vpop.f32.mrf.mxu0
    %v1521 = vadd.f32 0.0, %v1520
    %v1522 = vpop.f32.mrf.mxu0
    %v1523 = vpop.f32.mrf.mxu0
    %v1524 = vpop.f32.mrf.mxu0
    %1525 = vdwg.mxu0
    %v1526 = vadd.f32 %v1478, %v1521
    %v1527 = vxor.u32 %v1526, 2147483648
    %v1528 = vmul.f32 %v1527, 1.442695
    %v1529 = vpow.pop %v1528
    %v1530 = vadd.f32 %v1529, 1.0
    %v1531 = vrcp.pop %v1530
    %v1532 = vmul.f32 1.0, %v1531
    %v1533 = vtanh.pop %v1526
    %v1534 = vmul.f32 %v1532, %v1466
    %1536 = vrot.lane.b32.xlu0 %v1533, 64
    %v1537 = vpop.permute.xlu0 %1536
    %v1539 = vmul.f32 %v1532, %v1537
    %1541 = vrot.lane.b32.xlu0 %v1539, 32
    %v1542 = vpop.permute.xlu0 %1541
    %v1544 = vadd.f32 %v1534, %v1542
    %v1545 = vtanh.pop %v1544
    %1547 = vrot.lane.b32.xlu0 %v1545, 64
    %v1548 = vpop.permute.xlu0 %1547
    %v1550 = vmul.f32 %v1532, %v1548
    %1552 = vrot.lane.b32.xlu0 %v1550, 32
    %v1553 = vpop.permute.xlu0 %1552
    %1555 = vst.msk [vmem:[%s569] sm:$0x3] %vm409, %v1553
    %v1556 = vld [vmem:[%s571] sm:$0x3]
    %v1557 = vpack.c.bf16 %v1550, %v1550
    %1559 = vrot.lane.b32.xlu0 %v1557, 32
    %v1560 = vpop.permute.xlu0 %1559
    %v1562 = vsel %vm336, %v1560, 0
    %1564 = vmatprep.subr.bf16.mxu0 0
    %1565 = vmatpush1.bf16.msra.mxu0 0
    %1566 = vmatprep.subr.bf16.mxu0 0
    %1567 = vmatpush1.bf16.msra.mxu0 0
    %1568 = vmatprep.subr.bf16.mxu0 0
    %1569 = vmatpush1.bf16.msra.mxu0 0
    %1570 = vmatprep.subr.bf16.mxu0 0
    %1571 = vmatpush1.bf16.msra.mxu0 0
    %1572 = vmatprep.subr.bf16.mxu0 0
    %1573 = vmatpush1.bf16.msra.mxu0 0
    %1574 = vmatprep.subr.bf16.mxu0 0
    %1575 = vmatpush1.bf16.msra.mxu0 0
    %1576 = vmatprep.subr.bf16.mxu0 0
    %1577 = vmatpush1.bf16.msra.mxu0 %v1327
    %1578 = vmatprep.subr.bf16.mxu0 0
    %1579 = vmatpush1.bf16.msra.mxu0 %v1326
    %1580 = vmatprep.subr.bf16.mxu0 0
    %1581 = vmatpush2.bf16.msra.mxu0 0
    %1582 = vmatprep.subr.bf16.mxu0 0
    %1583 = vmatpush2.bf16.msra.mxu0 0
    %1584 = vmatprep.subr.bf16.mxu0 0
    %1585 = vmatpush2.bf16.msra.mxu0 0
    %1586 = vmatprep.subr.bf16.mxu0 0
    %1587 = vmatpush2.bf16.msra.mxu0 0
    %1588 = vmatprep.subr.bf16.mxu0 0
    %1589 = vmatpush2.bf16.msra.mxu0 0
    %1590 = vmatprep.subr.bf16.mxu0 0
    %1591 = vmatpush2.bf16.msra.mxu0 0
    %1592 = vmatprep.subr.bf16.mxu0 0
    %1593 = vmatpush2.bf16.msra.mxu0 0
    %1594 = vmatprep.subr.bf16.mxu0 0
    %1595 = vmatpush2.bf16.msra.mxu0 0
    %1596 = vmatprep.mubr.bf16.mxu0 0
    %1597 = vmatmul.mubr.bf16.gmra.mxu0 %v1562
    %v1598 = vpop.f32.mrf.mxu0
    %v1599 = vadd.f32 0.0, %v1598
    %v1600 = vpop.f32.mrf.mxu0
    %v1601 = vpop.f32.mrf.mxu0
    %v1602 = vpop.f32.mrf.mxu0
    %1603 = vdwg.mxu0
    %v1604 = vadd.f32 %v1556, %v1599
    %v1605 = vxor.u32 %v1604, 2147483648
    %v1606 = vmul.f32 %v1605, 1.442695
    %v1607 = vpow.pop %v1606
    %v1608 = vadd.f32 %v1607, 1.0
    %v1609 = vrcp.pop %v1608
    %v1610 = vmul.f32 1.0, %v1609
    %v1611 = vtanh.pop %v1604
    %v1612 = vmul.f32 %v1610, %v1544
    %1614 = vrot.lane.b32.xlu0 %v1611, 64
    %v1615 = vpop.permute.xlu0 %1614
    %v1617 = vmul.f32 %v1610, %v1615
    %1619 = vrot.lane.b32.xlu0 %v1617, 32
    %v1620 = vpop.permute.xlu0 %1619
    %v1622 = vadd.f32 %v1612, %v1620
    %v1623 = vtanh.pop %v1622
    %1625 = vrot.lane.b32.xlu0 %v1623, 64
    %v1626 = vpop.permute.xlu0 %1625
    %v1628 = vmul.f32 %v1610, %v1626
    %1630 = vrot.lane.b32.xlu0 %v1628, 32
    %v1631 = vpop.permute.xlu0 %1630
    %1633 = vst.msk [vmem:[%s649] sm:$0x3] %vm409, %v1631
    %v1634 = vld [vmem:[%s651] sm:$0x3]
    %v1635 = vpack.c.bf16 %v1628, %v1628
    %1637 = vrot.lane.b32.xlu0 %v1635, 32
    %v1638 = vpop.permute.xlu0 %1637
    %v1640 = vsel %vm336, %v1638, 0
    %1642 = vmatprep.subr.bf16.mxu0 0
    %1643 = vmatpush1.bf16.msra.mxu0 0
    %1644 = vmatprep.subr.bf16.mxu0 0
    %1645 = vmatpush1.bf16.msra.mxu0 0
    %1646 = vmatprep.subr.bf16.mxu0 0
    %1647 = vmatpush1.bf16.msra.mxu0 0
    %1648 = vmatprep.subr.bf16.mxu0 0
    %1649 = vmatpush1.bf16.msra.mxu0 0
    %1650 = vmatprep.subr.bf16.mxu0 0
    %1651 = vmatpush1.bf16.msra.mxu0 0
    %1652 = vmatprep.subr.bf16.mxu0 0
    %1653 = vmatpush1.bf16.msra.mxu0 0
    %1654 = vmatprep.subr.bf16.mxu0 0
    %1655 = vmatpush1.bf16.msra.mxu0 %v1327
    %1656 = vmatprep.subr.bf16.mxu0 0
    %1657 = vmatpush1.bf16.msra.mxu0 %v1326
    %1658 = vmatprep.subr.bf16.mxu0 0
    %1659 = vmatpush2.bf16.msra.mxu0 0
    %1660 = vmatprep.subr.bf16.mxu0 0
    %1661 = vmatpush2.bf16.msra.mxu0 0
    %1662 = vmatprep.subr.bf16.mxu0 0
    %1663 = vmatpush2.bf16.msra.mxu0 0
    %1664 = vmatprep.subr.bf16.mxu0 0
    %1665 = vmatpush2.bf16.msra.mxu0 0
    %1666 = vmatprep.subr.bf16.mxu0 0
    %1667 = vmatpush2.bf16.msra.mxu0 0
    %1668 = vmatprep.subr.bf16.mxu0 0
    %1669 = vmatpush2.bf16.msra.mxu0 0
    %1670 = vmatprep.subr.bf16.mxu0 0
    %1671 = vmatpush2.bf16.msra.mxu0 0
    %1672 = vmatprep.subr.bf16.mxu0 0
    %1673 = vmatpush2.bf16.msra.mxu0 0
    %1674 = vmatprep.mubr.bf16.mxu0 0
    %1675 = vmatmul.mubr.bf16.gmra.mxu0 %v1640
    %v1676 = vpop.f32.mrf.mxu0
    %v1677 = vadd.f32 0.0, %v1676
    %v1678 = vpop.f32.mrf.mxu0
    %v1679 = vpop.f32.mrf.mxu0
    %v1680 = vpop.f32.mrf.mxu0
    %1681 = vdwg.mxu0
    %v1682 = vadd.f32 %v1634, %v1677
    %v1683 = vxor.u32 %v1682, 2147483648
    %v1684 = vmul.f32 %v1683, 1.442695
    %v1685 = vpow.pop %v1684
    %v1686 = vadd.f32 %v1685, 1.0
    %v1687 = vrcp.pop %v1686
    %v1688 = vmul.f32 1.0, %v1687
    %v1689 = vtanh.pop %v1682
    %v1690 = vmul.f32 %v1688, %v1622
    %1692 = vrot.lane.b32.xlu0 %v1689, 64
    %v1693 = vpop.permute.xlu0 %1692
    %v1695 = vmul.f32 %v1688, %v1693
    %1697 = vrot.lane.b32.xlu0 %v1695, 32
    %v1698 = vpop.permute.xlu0 %1697
    %v1700 = vadd.f32 %v1690, %v1698
    %v1701 = vtanh.pop %v1700
    %1703 = vrot.lane.b32.xlu0 %v1701, 64
    %v1704 = vpop.permute.xlu0 %1703
    %v1706 = vmul.f32 %v1688, %v1704
    %1708 = vrot.lane.b32.xlu0 %v1706, 32
    %v1709 = vpop.permute.xlu0 %1708
    %1711 = vst.msk [vmem:[%s729] sm:$0x3] %vm409, %v1709
    %v1712 = vld [vmem:[%s731] sm:$0x3]
    %v1713 = vpack.c.bf16 %v1706, %v1706
    %1715 = vrot.lane.b32.xlu0 %v1713, 32
    %v1716 = vpop.permute.xlu0 %1715
    %v1718 = vsel %vm336, %v1716, 0
    %1720 = vmatprep.subr.bf16.mxu0 0
    %1721 = vmatpush1.bf16.msra.mxu0 0
    %1722 = vmatprep.subr.bf16.mxu0 0
    %1723 = vmatpush1.bf16.msra.mxu0 0
    %1724 = vmatprep.subr.bf16.mxu0 0
    %1725 = vmatpush1.bf16.msra.mxu0 0
    %1726 = vmatprep.subr.bf16.mxu0 0
    %1727 = vmatpush1.bf16.msra.mxu0 0
    %1728 = vmatprep.subr.bf16.mxu0 0
    %1729 = vmatpush1.bf16.msra.mxu0 0
    %1730 = vmatprep.subr.bf16.mxu0 0
    %1731 = vmatpush1.bf16.msra.mxu0 0
    %1732 = vmatprep.subr.bf16.mxu0 0
    %1733 = vmatpush1.bf16.msra.mxu0 %v1327
    %1734 = vmatprep.subr.bf16.mxu0 0
    %1735 = vmatpush1.bf16.msra.mxu0 %v1326
    %1736 = vmatprep.subr.bf16.mxu0 0
    %1737 = vmatpush2.bf16.msra.mxu0 0
    %1738 = vmatprep.subr.bf16.mxu0 0
    %1739 = vmatpush2.bf16.msra.mxu0 0
    %1740 = vmatprep.subr.bf16.mxu0 0
    %1741 = vmatpush2.bf16.msra.mxu0 0
    %1742 = vmatprep.subr.bf16.mxu0 0
    %1743 = vmatpush2.bf16.msra.mxu0 0
    %1744 = vmatprep.subr.bf16.mxu0 0
    %1745 = vmatpush2.bf16.msra.mxu0 0
    %1746 = vmatprep.subr.bf16.mxu0 0
    %1747 = vmatpush2.bf16.msra.mxu0 0
    %1748 = vmatprep.subr.bf16.mxu0 0
    %1749 = vmatpush2.bf16.msra.mxu0 0
    %1750 = vmatprep.subr.bf16.mxu0 0
    %1751 = vmatpush2.bf16.msra.mxu0 0
    %1752 = vmatprep.mubr.bf16.mxu0 0
    %1753 = vmatmul.mubr.bf16.gmra.mxu0 %v1718
    %v1754 = vpop.f32.mrf.mxu0
    %v1755 = vadd.f32 0.0, %v1754
    %v1756 = vpop.f32.mrf.mxu0
    %v1757 = vpop.f32.mrf.mxu0
    %v1758 = vpop.f32.mrf.mxu0
    %1759 = vdwg.mxu0
    %v1760 = vadd.f32 %v1712, %v1755
    %v1761 = vxor.u32 %v1760, 2147483648
    %v1762 = vmul.f32 %v1761, 1.442695
    %v1763 = vpow.pop %v1762
    %v1764 = vadd.f32 %v1763, 1.0
    %v1765 = vrcp.pop %v1764
    %v1766 = vmul.f32 1.0, %v1765
    %v1767 = vtanh.pop %v1760
    %v1768 = vmul.f32 %v1766, %v1700
    %1770 = vrot.lane.b32.xlu0 %v1767, 64
    %v1771 = vpop.permute.xlu0 %1770
    %v1773 = vmul.f32 %v1766, %v1771
    %1775 = vrot.lane.b32.xlu0 %v1773, 32
    %v1776 = vpop.permute.xlu0 %1775
    %v1778 = vadd.f32 %v1768, %v1776
    %v1779 = vtanh.pop %v1778
    %1781 = vrot.lane.b32.xlu0 %v1779, 64
    %v1782 = vpop.permute.xlu0 %1781
    %v1784 = vmul.f32 %v1766, %v1782
    %1786 = vrot.lane.b32.xlu0 %v1784, 32
    %v1787 = vpop.permute.xlu0 %1786
    %1789 = vst.msk [vmem:[%s809] sm:$0x3] %vm409, %v1787
    %v1790 = vld [vmem:[%s811] sm:$0x3]
    %v1791 = vpack.c.bf16 %v1784, %v1784
    %1793 = vrot.lane.b32.xlu0 %v1791, 32
    %v1794 = vpop.permute.xlu0 %1793
    %v1796 = vsel %vm336, %v1794, 0
    %1798 = vmatprep.subr.bf16.mxu0 0
    %1799 = vmatpush1.bf16.msra.mxu0 0
    %1800 = vmatprep.subr.bf16.mxu0 0
    %1801 = vmatpush1.bf16.msra.mxu0 0
    %1802 = vmatprep.subr.bf16.mxu0 0
    %1803 = vmatpush1.bf16.msra.mxu0 0
    %1804 = vmatprep.subr.bf16.mxu0 0
    %1805 = vmatpush1.bf16.msra.mxu0 0
    %1806 = vmatprep.subr.bf16.mxu0 0
    %1807 = vmatpush1.bf16.msra.mxu0 0
    %1808 = vmatprep.subr.bf16.mxu0 0
    %1809 = vmatpush1.bf16.msra.mxu0 0
    %1810 = vmatprep.subr.bf16.mxu0 0
    %1811 = vmatpush1.bf16.msra.mxu0 %v1327
    %1812 = vmatprep.subr.bf16.mxu0 0
    %1813 = vmatpush1.bf16.msra.mxu0 %v1326
    %1814 = vmatprep.subr.bf16.mxu0 0
    %1815 = vmatpush2.bf16.msra.mxu0 0
    %1816 = vmatprep.subr.bf16.mxu0 0
    %1817 = vmatpush2.bf16.msra.mxu0 0
    %1818 = vmatprep.subr.bf16.mxu0 0
    %1819 = vmatpush2.bf16.msra.mxu0 0
    %1820 = vmatprep.subr.bf16.mxu0 0
    %1821 = vmatpush2.bf16.msra.mxu0 0
    %1822 = vmatprep.subr.bf16.mxu0 0
    %1823 = vmatpush2.bf16.msra.mxu0 0
    %1824 = vmatprep.subr.bf16.mxu0 0
    %1825 = vmatpush2.bf16.msra.mxu0 0
    %1826 = vmatprep.subr.bf16.mxu0 0
    %1827 = vmatpush2.bf16.msra.mxu0 0
    %1828 = vmatprep.subr.bf16.mxu0 0
    %1829 = vmatpush2.bf16.msra.mxu0 0
    %1830 = vmatprep.mubr.bf16.mxu0 0
    %1831 = vmatmul.mubr.bf16.gmra.mxu0 %v1796
    %v1832 = vpop.f32.mrf.mxu0
    %v1833 = vadd.f32 0.0, %v1832
    %v1834 = vpop.f32.mrf.mxu0
    %v1835 = vpop.f32.mrf.mxu0
    %v1836 = vpop.f32.mrf.mxu0
    %1837 = vdwg.mxu0
    %v1838 = vadd.f32 %v1790, %v1833
    %v1839 = vxor.u32 %v1838, 2147483648
    %v1840 = vmul.f32 %v1839, 1.442695
    %v1841 = vpow.pop %v1840
    %v1842 = vadd.f32 %v1841, 1.0
    %v1843 = vrcp.pop %v1842
    %v1844 = vmul.f32 1.0, %v1843
    %v1845 = vtanh.pop %v1838
    %v1846 = vmul.f32 %v1844, %v1778
    %1848 = vrot.lane.b32.xlu0 %v1845, 64
    %v1849 = vpop.permute.xlu0 %1848
    %v1851 = vmul.f32 %v1844, %v1849
    %1853 = vrot.lane.b32.xlu0 %v1851, 32
    %v1854 = vpop.permute.xlu0 %1853
    %v1856 = vadd.f32 %v1846, %v1854
    %v1857 = vtanh.pop %v1856
    %1859 = vrot.lane.b32.xlu0 %v1857, 64
    %v1860 = vpop.permute.xlu0 %1859
    %v1862 = vmul.f32 %v1844, %v1860
    %1864 = vrot.lane.b32.xlu0 %v1862, 32
    %v1865 = vpop.permute.xlu0 %1864
    %1867 = vst.msk [vmem:[%s889] sm:$0x3] %vm409, %v1865
    %v1868 = vld [vmem:[%s891] sm:$0x3]
    %v1869 = vpack.c.bf16 %v1862, %v1862
    %1871 = vrot.lane.b32.xlu0 %v1869, 32
    %v1872 = vpop.permute.xlu0 %1871
    %v1874 = vsel %vm336, %v1872, 0
    %1876 = vmatprep.subr.bf16.mxu0 0
    %1877 = vmatpush1.bf16.msra.mxu0 0
    %1878 = vmatprep.subr.bf16.mxu0 0
    %1879 = vmatpush1.bf16.msra.mxu0 0
    %1880 = vmatprep.subr.bf16.mxu0 0
    %1881 = vmatpush1.bf16.msra.mxu0 0
    %1882 = vmatprep.subr.bf16.mxu0 0
    %1883 = vmatpush1.bf16.msra.mxu0 0
    %1884 = vmatprep.subr.bf16.mxu0 0
    %1885 = vmatpush1.bf16.msra.mxu0 0
    %1886 = vmatprep.subr.bf16.mxu0 0
    %1887 = vmatpush1.bf16.msra.mxu0 0
    %1888 = vmatprep.subr.bf16.mxu0 0
    %1889 = vmatpush1.bf16.msra.mxu0 %v1327
    %1890 = vmatprep.subr.bf16.mxu0 0
    %1891 = vmatpush1.bf16.msra.mxu0 %v1326
    %1892 = vmatprep.subr.bf16.mxu0 0
    %1893 = vmatpush2.bf16.msra.mxu0 0
    %1894 = vmatprep.subr.bf16.mxu0 0
    %1895 = vmatpush2.bf16.msra.mxu0 0
    %1896 = vmatprep.subr.bf16.mxu0 0
    %1897 = vmatpush2.bf16.msra.mxu0 0
    %1898 = vmatprep.subr.bf16.mxu0 0
    %1899 = vmatpush2.bf16.msra.mxu0 0
    %1900 = vmatprep.subr.bf16.mxu0 0
    %1901 = vmatpush2.bf16.msra.mxu0 0
    %1902 = vmatprep.subr.bf16.mxu0 0
    %1903 = vmatpush2.bf16.msra.mxu0 0
    %1904 = vmatprep.subr.bf16.mxu0 0
    %1905 = vmatpush2.bf16.msra.mxu0 0
    %1906 = vmatprep.subr.bf16.mxu0 0
    %1907 = vmatpush2.bf16.msra.mxu0 0
    %1908 = vmatprep.mubr.bf16.mxu0 0
    %1909 = vmatmul.mubr.bf16.gmra.mxu0 %v1874
    %v1910 = vpop.f32.mrf.mxu0
    %v1911 = vadd.f32 0.0, %v1910
    %v1912 = vpop.f32.mrf.mxu0
    %v1913 = vpop.f32.mrf.mxu0
    %v1914 = vpop.f32.mrf.mxu0
    %1915 = vdwg.mxu0
    %v1916 = vadd.f32 %v1868, %v1911
    %v1917 = vxor.u32 %v1916, 2147483648
    %v1918 = vmul.f32 %v1917, 1.442695
    %v1919 = vpow.pop %v1918
    %v1920 = vadd.f32 %v1919, 1.0
    %v1921 = vrcp.pop %v1920
    %v1922 = vmul.f32 1.0, %v1921
    %v1923 = vtanh.pop %v1916
    %v1924 = vmul.f32 %v1922, %v1856
    %1926 = vrot.lane.b32.xlu0 %v1923, 64
    %v1927 = vpop.permute.xlu0 %1926
    %v1929 = vmul.f32 %v1922, %v1927
    %1931 = vrot.lane.b32.xlu0 %v1929, 32
    %v1932 = vpop.permute.xlu0 %1931
    %v1934 = vadd.f32 %v1924, %v1932
    %v1935 = vtanh.pop %v1934
    %1937 = vrot.lane.b32.xlu0 %v1935, 64
    %v1938 = vpop.permute.xlu0 %1937
    %v1940 = vmul.f32 %v1922, %v1938
    %1942 = vrot.lane.b32.xlu0 %v1940, 32
    %v1943 = vpop.permute.xlu0 %1942
    %1945 = vst.msk [vmem:[%s969] sm:$0x3] %vm409, %v1943
    %v1946 = vld [vmem:[%s7] sm:$0xf]
    %v1947 = vld [vmem:[%s7 + $0x4] sm:$0xf]
    %v1948 = vld [vmem:[%s7 + $0x8] sm:$0xf]
    %v1949 = vld [vmem:[%s7 + $0xc] sm:$0xf]
    %v1950 = vld [vmem:[#allocation3] sm:$0x1]
    %v1951 = vld [vmem:[#allocation3 + $0x2] sm:$0x1]
    %v1952 = vld [vmem:[#allocation3 + $0x4] sm:$0x1]
    %v1953 = vld [vmem:[#allocation3 + $0x6] sm:$0x1]
    %v1954 = vld [vmem:[#allocation3 + $0x8] sm:$0x1]
    %v1955 = vld [vmem:[#allocation3 + $0xa] sm:$0x1]
    %v1956 = vld [vmem:[#allocation3 + $0xc] sm:$0x1]
    %v1957 = vld [vmem:[#allocation3 + $0xe] sm:$0x1]
    %v1958 = vpack.c.bf16 %v1950, %v1950
    %v1959 = vpack.c.bf16 %v1951, %v1951
    %v1960 = vpack.c.bf16 %v1952, %v1952
    %v1961 = vpack.c.bf16 %v1953, %v1953
    %v1962 = vpack.c.bf16 %v1954, %v1954
    %v1963 = vpack.c.bf16 %v1955, %v1955
    %v1964 = vpack.c.bf16 %v1956, %v1956
    %v1965 = vpack.c.bf16 %v1957, %v1957
    %v1974 = vunpack.c.l.b16 %v1958
    %v1975 = vunpack.c.l.b16 %v1959
    %v1976 = vunpack.c.l.b16 %v1960
    %v1977 = vunpack.c.l.b16 %v1961
    %v1978 = vunpack.c.l.b16 %v1962
    %v1979 = vunpack.c.l.b16 %v1963
    %v1980 = vunpack.c.l.b16 %v1964
    %v1981 = vunpack.c.l.b16 %v1965
    %v1982 = vrot.slane %v1975, 7
    %v1983 = vsel %vm1019, %v1982, %v1974
    %v1984 = vrot.slane %v1976, 6
    %v1985 = vsel %vm1022, %v1984, %v1983
    %v1986 = vrot.slane %v1977, 5
    %v1987 = vsel %vm1025, %v1986, %v1985
    %v1988 = vrot.slane %v1978, 4
    %v1989 = vsel %vm1028, %v1988, %v1987
    %v1990 = vrot.slane %v1979, 3
    %v1991 = vsel %vm1031, %v1990, %v1989
    %v1992 = vrot.slane %v1980, 2
    %v1993 = vsel %vm1034, %v1992, %v1991
    %v1994 = vrot.slane %v1981, 1
    %v1995 = vsel %vm1037, %v1994, %v1993
    %v1996 = vpack.c.b16 %v1995, %v1995
    %v2001 = vunpack.c.l.b16 %v1946
    %v2002 = vunpack.c.l.b16 %v1947
    %v2003 = vunpack.c.l.b16 %v1948
    %v2004 = vunpack.c.l.b16 %v1949
    %v2005 = vpack.c.b16 %v2002, %v2001
    %v2006 = vpack.c.b16 %v2004, %v2003
    %v2010 = vsel %vm336, %v1996, 0
    %2012 = vmatprep.subr.bf16.mxu0 0
    %2013 = vmatpush1.bf16.msra.mxu0 0
    %2014 = vmatprep.subr.bf16.mxu0 0
    %2015 = vmatpush1.bf16.msra.mxu0 0
    %2016 = vmatprep.subr.bf16.mxu0 0
    %2017 = vmatpush1.bf16.msra.mxu0 0
    %2018 = vmatprep.subr.bf16.mxu0 0
    %2019 = vmatpush1.bf16.msra.mxu0 0
    %2020 = vmatprep.subr.bf16.mxu0 0
    %2021 = vmatpush1.bf16.msra.mxu0 0
    %2022 = vmatprep.subr.bf16.mxu0 0
    %2023 = vmatpush1.bf16.msra.mxu0 0
    %2024 = vmatprep.subr.bf16.mxu0 0
    %2025 = vmatpush1.bf16.msra.mxu0 %v2006
    %2026 = vmatprep.subr.bf16.mxu0 0
    %2027 = vmatpush1.bf16.msra.mxu0 %v2005
    %2028 = vmatprep.subr.bf16.mxu0 0
    %2029 = vmatpush2.bf16.msra.mxu0 0
    %2030 = vmatprep.subr.bf16.mxu0 0
    %2031 = vmatpush2.bf16.msra.mxu0 0
    %2032 = vmatprep.subr.bf16.mxu0 0
    %2033 = vmatpush2.bf16.msra.mxu0 0
    %2034 = vmatprep.subr.bf16.mxu0 0
    %2035 = vmatpush2.bf16.msra.mxu0 0
    %2036 = vmatprep.subr.bf16.mxu0 0
    %2037 = vmatpush2.bf16.msra.mxu0 0
    %2038 = vmatprep.subr.bf16.mxu0 0
    %2039 = vmatpush2.bf16.msra.mxu0 0
    %2040 = vmatprep.subr.bf16.mxu0 0
    %2041 = vmatpush2.bf16.msra.mxu0 0
    %2042 = vmatprep.subr.bf16.mxu0 0
    %2043 = vmatpush2.bf16.msra.mxu0 0
    %2044 = vmatprep.mubr.bf16.mxu0 0
    %2045 = vmatmul.mubr.bf16.gmra.mxu0 %v2010
    %v2046 = vpop.f32.mrf.mxu0
    %v2047 = vadd.f32 0.0, %v2046
    %v2048 = vpop.f32.mrf.mxu0
    %v2049 = vpop.f32.mrf.mxu0
    %v2050 = vpop.f32.mrf.mxu0
    %2051 = vdwg.mxu0
    %vm2052 = vcmask 15360
    %2053 = vst.msk [vmem:[%s8] sm:$0xff] %vm2052, %v2047
    %v2054 = vld [vmem:[#allocation3 + $0x1] sm:$0x1]
    %v2055 = vld [vmem:[#allocation3 + $0x3] sm:$0x1]
    %v2056 = vld [vmem:[#allocation3 + $0x5] sm:$0x1]
    %v2057 = vld [vmem:[#allocation3 + $0x7] sm:$0x1]
    %v2058 = vld [vmem:[#allocation3 + $0x9] sm:$0x1]
    %v2059 = vld [vmem:[#allocation3 + $0xb] sm:$0x1]
    %v2060 = vld [vmem:[#allocation3 + $0xd] sm:$0x1]
    %v2061 = vld [vmem:[#allocation3 + $0xf] sm:$0x1]
    %v2062 = vpack.c.bf16 %v2054, %v2054
    %v2063 = vpack.c.bf16 %v2055, %v2055
    %v2064 = vpack.c.bf16 %v2056, %v2056
    %v2065 = vpack.c.bf16 %v2057, %v2057
    %v2066 = vpack.c.bf16 %v2058, %v2058
    %v2067 = vpack.c.bf16 %v2059, %v2059
    %v2068 = vpack.c.bf16 %v2060, %v2060
    %v2069 = vpack.c.bf16 %v2061, %v2061
    %v2078 = vunpack.c.l.b16 %v2062
    %v2079 = vunpack.c.l.b16 %v2063
    %v2080 = vunpack.c.l.b16 %v2064
    %v2081 = vunpack.c.l.b16 %v2065
    %v2082 = vunpack.c.l.b16 %v2066
    %v2083 = vunpack.c.l.b16 %v2067
    %v2084 = vunpack.c.l.b16 %v2068
    %v2085 = vunpack.c.l.b16 %v2069
    %v2086 = vrot.slane %v2079, 7
    %v2087 = vsel %vm1019, %v2086, %v2078
    %v2088 = vrot.slane %v2080, 6
    %v2089 = vsel %vm1022, %v2088, %v2087
    %v2090 = vrot.slane %v2081, 5
    %v2091 = vsel %vm1025, %v2090, %v2089
    %v2092 = vrot.slane %v2082, 4
    %v2093 = vsel %vm1028, %v2092, %v2091
    %v2094 = vrot.slane %v2083, 3
    %v2095 = vsel %vm1031, %v2094, %v2093
    %v2096 = vrot.slane %v2084, 2
    %v2097 = vsel %vm1034, %v2096, %v2095
    %v2098 = vrot.slane %v2085, 1
    %v2099 = vsel %vm1037, %v2098, %v2097
    %v2100 = vpack.c.b16 %v2099, %v2099
    %v2102 = vsel %vm336, %v2100, 0
    %2104 = vmatprep.subr.bf16.mxu0 0
    %2105 = vmatpush1.bf16.msra.mxu0 0
    %2106 = vmatprep.subr.bf16.mxu0 0
    %2107 = vmatpush1.bf16.msra.mxu0 0
    %2108 = vmatprep.subr.bf16.mxu0 0
    %2109 = vmatpush1.bf16.msra.mxu0 0
    %2110 = vmatprep.subr.bf16.mxu0 0
    %2111 = vmatpush1.bf16.msra.mxu0 0
    %2112 = vmatprep.subr.bf16.mxu0 0
    %2113 = vmatpush1.bf16.msra.mxu0 0
    %2114 = vmatprep.subr.bf16.mxu0 0
    %2115 = vmatpush1.bf16.msra.mxu0 0
    %2116 = vmatprep.subr.bf16.mxu0 0
    %2117 = vmatpush1.bf16.msra.mxu0 %v2006
    %2118 = vmatprep.subr.bf16.mxu0 0
    %2119 = vmatpush1.bf16.msra.mxu0 %v2005
    %2120 = vmatprep.subr.bf16.mxu0 0
    %2121 = vmatpush2.bf16.msra.mxu0 0
    %2122 = vmatprep.subr.bf16.mxu0 0
    %2123 = vmatpush2.bf16.msra.mxu0 0
    %2124 = vmatprep.subr.bf16.mxu0 0
    %2125 = vmatpush2.bf16.msra.mxu0 0
    %2126 = vmatprep.subr.bf16.mxu0 0
    %2127 = vmatpush2.bf16.msra.mxu0 0
    %2128 = vmatprep.subr.bf16.mxu0 0
    %2129 = vmatpush2.bf16.msra.mxu0 0
    %2130 = vmatprep.subr.bf16.mxu0 0
    %2131 = vmatpush2.bf16.msra.mxu0 0
    %2132 = vmatprep.subr.bf16.mxu0 0
    %2133 = vmatpush2.bf16.msra.mxu0 0
    %2134 = vmatprep.subr.bf16.mxu0 0
    %2135 = vmatpush2.bf16.msra.mxu0 0
    %2136 = vmatprep.mubr.bf16.mxu0 0
    %2137 = vmatmul.mubr.bf16.gmra.mxu0 %v2102
    %v2138 = vpop.f32.mrf.mxu0
    %v2139 = vadd.f32 0.0, %v2138
    %v2140 = vpop.f32.mrf.mxu0
    %v2141 = vpop.f32.mrf.mxu0
    %v2142 = vpop.f32.mrf.mxu0
    %2143 = vdwg.mxu0
    %s2144 = scalar_lea.vmem %s8, 8
    %2145 = vst.msk [vmem:[%s2144] sm:$0xff] %vm2052, %v2139
    // Predicated region
    $region50: #{np_lstm_small_forward.1} parent=1 // pred_check
      _
    $region51: #{np_lstm_small_forward.1} parent=1 // pred_check_branch
      %2147 = sbr.rel (0) target = $region53
    $region52: #{np_lstm_small_forward.1} parent=1 // pred_region
      _
    $region53: #{np_lstm_small_forward.1} parent=1 // pred_fallthru
      _
    // Predicated region
    $region54: #{np_lstm_small_forward.1} parent=1 // pred_check
      _
    $region55: #{np_lstm_small_forward.1} parent=1 // pred_check_branch
      %2149 = sbr.rel (0) target = $region57
    $region56: #{np_lstm_small_forward.1} parent=1 // pred_region
      _
    $region57: #{np_lstm_small_forward.1} parent=1 // pred_fallthru
      _
    %2150 = vsyncpa [#allocation5], 1
    %2151 = vsyncpa [#allocation7], 1
    %2152 = vsyncpa [#allocation10], 1

</llo_original>
